<compile_context>
chip_gen: v7x
topology: tpu7x:2x2x1
jax: 0.10.0
libtpu: 0.0.40
codegen_flags: <defaults>
</compile_context>

<pallas_src>
import jax
import jax.numpy as jnp
from jax.experimental import pallas as pl
from jax.experimental.pallas import tpu as pltpu

EPS = 1e-5


def one_dim_conv_block_kernel(
    x_ref,       # (tile_b, C)   f32
    wa_ref,      # (C, C)        bf16, already scaled by 1/sqrt(C)
    wf1_ref,     # (C, C)        bf16
    wf2_ref,     # (C, C)        bf16
    w2_ref,      # (C, C_out)    bf16
    vec_ref,     # (8, C)        f32: [ba, bn1_s, bn1_b, bf1, bf2, bn2_s, bn2_b, 0]
    b2_ref,      # (1, C_out)    f32
    o_ref,       # (tile_b, C_out)
):
    x = x_ref[...].astype(jnp.float32)
    vec = vec_ref[...]
    ba    = vec[0:1, :]
    bn1_s = vec[1:2, :]
    bn1_b = vec[2:3, :]
    bf1   = vec[3:4, :]
    bf2   = vec[4:5, :]
    bn2_s = vec[5:6, :]
    bn2_b = vec[6:7, :]

    # --- OneDimAttention(q=x, k=x, v=x); 1/sqrt(C) folded into wa ---
    a = jnp.dot((x * x).astype(jnp.bfloat16), wa_ref[...],
                preferred_element_type=jnp.float32) + ba
    a = a - jnp.max(a, axis=-1, keepdims=True)
    e = jnp.exp(a)
    s = e * pl.reciprocal(jnp.sum(e, axis=-1, keepdims=True), approx=True)
    h = s * x

    # --- residual + folded batchnorm1 (eval: running stats) ---
    bn1 = (x + h) * bn1_s + bn1_b

    # --- ffn: Linear -> ReLU -> Linear -> ReLU ---
    f = jnp.dot(bn1.astype(jnp.bfloat16), wf1_ref[...],
                preferred_element_type=jnp.float32) + bf1
    f = jnp.maximum(f, 0.0)
    f = jnp.dot(f.astype(jnp.bfloat16), wf2_ref[...],
                preferred_element_type=jnp.float32) + bf2
    f = jnp.maximum(f, 0.0)

    # --- residual + folded batchnorm2 ---
    bn2 = (bn1 + f) * bn2_s + bn2_b

    # --- linear2 (+ dropout1d: identity in eval mode) ---
    out = jnp.dot(bn2.astype(jnp.bfloat16), w2_ref[...],
                  preferred_element_type=jnp.float32) + b2_ref[...]
    o_ref[...] = out.astype(o_ref.dtype)


def _build_call(B_pad, C, C_out, tile_b, n_tiles, out_dtype, weight_bytes,
                single_buffer_weights):
    def const_spec(shape, single_buffer):
        idx = lambda i, n=len(shape): (0,) * n   # bind arity (avoid late binding)
        if single_buffer:
            # Grid-invariant operand: one resident copy is enough.
            return pl.BlockSpec(shape, idx, pipeline_mode=pl.Buffered(1))
        return pl.BlockSpec(shape, idx)

    in_specs = [
        pl.BlockSpec((tile_b, C), lambda i: (i, 0)),        # x
        const_spec((C, C), single_buffer_weights),          # wa
        const_spec((C, C), single_buffer_weights),          # wf1
        const_spec((C, C), single_buffer_weights),          # wf2
        const_spec((C, C_out), single_buffer_weights),      # w2
        const_spec((8, C), False),                          # stacked vectors (tiny)
        const_spec((1, C_out), False),                      # b2 (tiny)
    ]
    out_spec = pl.BlockSpec((tile_b, C_out), lambda i: (i, 0))

    weight_copies = 1 if single_buffer_weights else 2
    act_bytes = 2 * (tile_b * C * 4) + 2 * (tile_b * C_out * 4)   # dbl-buffered x/out
    vec_bytes = 2 * (8 * C + C_out) * 4
    vmem_limit = int(min(112 << 20,
                         max(32 << 20,
                             weight_copies * weight_bytes + act_bytes
                             + vec_bytes + (8 << 20))))

    return pl.pallas_call(
        one_dim_conv_block_kernel,
        out_shape=jax.ShapeDtypeStruct((B_pad, C_out), out_dtype),
        grid_spec=pltpu.PrefetchScalarGridSpec(
            num_scalar_prefetch=0,
            grid=(n_tiles,),
            in_specs=in_specs,
            out_specs=out_spec,
        ),
        compiler_params=pltpu.CompilerParams(
            dimension_semantics=("parallel",),
            vmem_limit_bytes=vmem_limit,
        ),
    )


def one_dim_conv_block(x, params, *, tile_b=256):
    B, C = x.shape
    C_out = params["w2"].shape[1]

    # Clamp tile_b to the (8-aligned) batch, then pad B up to a tile multiple.
    tile_b = max(8, min(tile_b, pl.cdiv(B, 8) * 8))
    n_tiles = pl.cdiv(B, tile_b)
    B_pad = n_tiles * tile_b
    x_p = jnp.pad(x, ((0, B_pad - B), (0, 0))) if B_pad != B else x

    # --- wrapper-side folding / casting ---
    inv_sqrt_c = 1.0 / float(C) ** 0.5
    wa  = (params["wa"].astype(jnp.float32) * inv_sqrt_c).astype(jnp.bfloat16)
    wf1 = params["wf1"].astype(jnp.bfloat16)
    wf2 = params["wf2"].astype(jnp.bfloat16)
    w2  = params["w2"].astype(jnp.bfloat16)

    bn1_s = params["g1"] * jax.lax.rsqrt(params["v1"] + EPS)
    bn1_b = params["be1"] - params["m1"] * bn1_s
    bn2_s = params["g2"] * jax.lax.rsqrt(params["v2"] + EPS)
    bn2_b = params["be2"] - params["m2"] * bn2_s

    vecs = jnp.concatenate(
        [params["ba"], bn1_s, bn1_b, params["bf1"], params["bf2"],
         bn2_s, bn2_b, jnp.zeros((1, C), jnp.float32)],
        axis=0).astype(jnp.float32)                      # (8, C)
    b2 = params["b2"].astype(jnp.float32)                # (1, C_out)

    weight_bytes = sum(int(a.size) * a.dtype.itemsize for a in (wa, wf1, wf2, w2))
    args = (x_p, wa, wf1, wf2, w2, vecs, b2)

    try:
        call = _build_call(B_pad, C, C_out, tile_b, n_tiles, x.dtype,
                           weight_bytes, single_buffer_weights=True)
        out = jax.block_until_ready(call(*args))
    except Exception:
        # pipeline_mode=pl.Buffered(1) not supported by this JAX/Mosaic version:
        # fall back to default double-buffering (correct, just more VMEM).
        call = _build_call(B_pad, C, C_out, tile_b, n_tiles, x.dtype,
                           weight_bytes, single_buffer_weights=False)
        out = call(*args)

    return out[:B]


def reference(x, p):
    """Pure-JAX reference mirroring the kernel's bf16-operand / f32-accum matmuls."""
    C = x.shape[-1]
    xf = x.astype(jnp.float32)
    wa  = (p["wa"] / jnp.sqrt(jnp.float32(C))).astype(jnp.bfloat16)
    wf1 = p["wf1"].astype(jnp.bfloat16)
    wf2 = p["wf2"].astype(jnp.bfloat16)
    w2  = p["w2"].astype(jnp.bfloat16)

    a = jnp.dot((xf * xf).astype(jnp.bfloat16), wa,
                preferred_element_type=jnp.float32) + p["ba"]
    s = jax.nn.softmax(a, axis=-1)
    h = s * xf

    s1 = p["g1"] * jax.lax.rsqrt(p["v1"] + EPS)
    b1 = p["be1"] - p["m1"] * s1
    bn1 = (xf + h) * s1 + b1

    f = jnp.maximum(jnp.dot(bn1.astype(jnp.bfloat16), wf1,
                            preferred_element_type=jnp.float32) + p["bf1"], 0.0)
    f = jnp.maximum(jnp.dot(f.astype(jnp.bfloat16), wf2,
                            preferred_element_type=jnp.float32) + p["bf2"], 0.0)

    s2 = p["g2"] * jax.lax.rsqrt(p["v2"] + EPS)
    b2 = p["be2"] - p["m2"] * s2
    bn2 = (bn1 + f) * s2 + b2
    return jnp.dot(bn2.astype(jnp.bfloat16), w2,
                   preferred_element_type=jnp.float32) + p["b2"]


if __name__ == "__main__":
    # Small, tile-friendly stand-ins for the real 2048/2048 channel sizes.
    # B=12 deliberately not a multiple of tile_b to exercise the cdiv+padding path.
    B, C, C_out = 12, 128, 128

    key = jax.random.PRNGKey(0)
    ks = jax.random.split(key, 16)
    scale = 0.05

    params = {
        # attention linear, stored as (in, out) == PyTorch W.T
        "wa":  scale * jax.random.normal(ks[0], (C, C), jnp.float32),
        "ba":  scale * jax.random.normal(ks[1], (1, C), jnp.float32),
        # batchnorm1 (weight, bias, running_mean, running_var>0)
        "g1":  1.0 + scale * jax.random.normal(ks[2], (1, C), jnp.float32),
        "be1": scale * jax.random.normal(ks[3], (1, C), jnp.float32),
        "m1":  scale * jax.random.normal(ks[4], (1, C), jnp.float32),
        "v1":  1.0 + 0.1 * jax.nn.sigmoid(jax.random.normal(ks[5], (1, C), jnp.float32)),
        # ffn
        "wf1": scale * jax.random.normal(ks[6], (C, C), jnp.float32),
        "bf1": scale * jax.random.normal(ks[7], (1, C), jnp.float32),
        "wf2": scale * jax.random.normal(ks[8], (C, C), jnp.float32),
        "bf2": scale * jax.random.normal(ks[9], (1, C), jnp.float32),
        # batchnorm2
        "g2":  1.0 + scale * jax.random.normal(ks[10], (1, C), jnp.float32),
        "be2": scale * jax.random.normal(ks[11], (1, C), jnp.float32),
        "m2":  scale * jax.random.normal(ks[12], (1, C), jnp.float32),
        "v2":  1.0 + 0.1 * jax.nn.sigmoid(jax.random.normal(ks[13], (1, C), jnp.float32)),
        # linear2
        "w2":  scale * jax.random.normal(ks[14], (C, C_out), jnp.float32),
        "b2":  scale * jax.random.normal(ks[15], (1, C_out), jnp.float32),
    }

    x = jax.random.normal(jax.random.PRNGKey(42), (B, C), jnp.float32)

    out = one_dim_conv_block(x, params, tile_b=256)
    out = jax.block_until_ready(out)

    ref = reference(x, params)
    assert out.shape == (B, C_out)
    assert jnp.allclose(out, ref, atol=5e-3, rtol=5e-3), "mismatch vs reference"
    print("KERNEL_OK")
</pallas_src>

<mosaic_0001>
module attributes {stable_mosaic.version = 11 : i64} {
  func.func @one_dim_conv_block_kernel(%arg0: i32, %arg1: memref<16x128xf32, #tpu.memory_space<vmem>>, %arg2: memref<128x128xbf16, #tpu.memory_space<vmem>>, %arg3: memref<128x128xbf16, #tpu.memory_space<vmem>>, %arg4: memref<128x128xbf16, #tpu.memory_space<vmem>>, %arg5: memref<128x128xbf16, #tpu.memory_space<vmem>>, %arg6: memref<8x128xf32, #tpu.memory_space<vmem>>, %arg7: memref<1x128xf32, #tpu.memory_space<vmem>>, %arg8: memref<16x128xf32, #tpu.memory_space<vmem>>) attributes {dimension_semantics = [#tpu.dimension_semantics<parallel>], iteration_bounds = array<i64: 1>, scalar_prefetch = 0 : i64, scratch_operands = 0 : i64, tpu.core_type = #tpu.core_type<tc>, window_params = [{transform_indices = @transform_0, window_bounds = array<i64: 16, 128>}, {pipeline_mode = #tpu.pipeline_mode<synchronous>, transform_indices = @transform_1, window_bounds = array<i64: 128, 128>}, {pipeline_mode = #tpu.pipeline_mode<synchronous>, transform_indices = @transform_2, window_bounds = array<i64: 128, 128>}, {pipeline_mode = #tpu.pipeline_mode<synchronous>, transform_indices = @transform_3, window_bounds = array<i64: 128, 128>}, {pipeline_mode = #tpu.pipeline_mode<synchronous>, transform_indices = @transform_4, window_bounds = array<i64: 128, 128>}, {pipeline_mode = #tpu.pipeline_mode<synchronous>, transform_indices = @transform_5, window_bounds = array<i64: 8, 128>}, {pipeline_mode = #tpu.pipeline_mode<synchronous>, transform_indices = @transform_6, window_bounds = array<i64: 1, 128>}, {transform_indices = @transform_7, window_bounds = array<i64: 16, 128>}]} {
    %c0 = arith.constant 0 : index
    %c0_0 = arith.constant 0 : index
    %0 = vector.load %arg1[%c0, %c0_0] : memref<16x128xf32, #tpu.memory_space<vmem>>, vector<16x128xf32>
    %c0_1 = arith.constant 0 : index
    %c0_2 = arith.constant 0 : index
    %1 = vector.load %arg6[%c0_1, %c0_2] : memref<8x128xf32, #tpu.memory_space<vmem>>, vector<8x128xf32>
    %2 = vector.extract_strided_slice %1 {offsets = [0, 0], sizes = [1, 128], strides = [1, 1]} : vector<8x128xf32> to vector<1x128xf32>
    %3 = vector.extract_strided_slice %1 {offsets = [1, 0], sizes = [1, 128], strides = [1, 1]} : vector<8x128xf32> to vector<1x128xf32>
    %4 = vector.extract_strided_slice %1 {offsets = [2, 0], sizes = [1, 128], strides = [1, 1]} : vector<8x128xf32> to vector<1x128xf32>
    %5 = vector.extract_strided_slice %1 {offsets = [3, 0], sizes = [1, 128], strides = [1, 1]} : vector<8x128xf32> to vector<1x128xf32>
    %6 = vector.extract_strided_slice %1 {offsets = [4, 0], sizes = [1, 128], strides = [1, 1]} : vector<8x128xf32> to vector<1x128xf32>
    %7 = vector.extract_strided_slice %1 {offsets = [5, 0], sizes = [1, 128], strides = [1, 1]} : vector<8x128xf32> to vector<1x128xf32>
    %8 = vector.extract_strided_slice %1 {offsets = [6, 0], sizes = [1, 128], strides = [1, 1]} : vector<8x128xf32> to vector<1x128xf32>
    %9 = arith.mulf %0, %0 : vector<16x128xf32>
    %10 = arith.truncf %9 : vector<16x128xf32> to vector<16x128xbf16>
    %c0_3 = arith.constant 0 : index
    %c0_4 = arith.constant 0 : index
    %11 = vector.load %arg2[%c0_3, %c0_4] : memref<128x128xbf16, #tpu.memory_space<vmem>>, vector<128x128xbf16>
    %cst = arith.constant dense<0.000000e+00> : vector<16x128xf32>
    %12 = tpu.matmul %10, %11, %cst {dimension_numbers = #tpu.dot_dimension_numbers<[1], [0], [0], [1], [0, 0, 1, 1], [], []>} : vector<16x128xbf16>, vector<128x128xbf16>, vector<16x128xf32> -> vector<16x128xf32>
    %13 = vector.broadcast %2 : vector<1x128xf32> to vector<16x128xf32>
    %14 = arith.addf %12, %13 : vector<16x128xf32>
    %cst_5 = arith.constant dense<0xFF800000> : vector<16xf32>
    %15 = vector.multi_reduction <maximumf>, %14, %cst_5 [1] : vector<16x128xf32> to vector<16xf32>
    %16 = vector.shape_cast %15 : vector<16xf32> to vector<16x1xf32>
    %17 = vector.broadcast %16 : vector<16x1xf32> to vector<16x128xf32>
    %18 = arith.subf %14, %17 : vector<16x128xf32>
    %19 = math.exp %18 : vector<16x128xf32>
    %cst_6 = arith.constant dense<0.000000e+00> : vector<16xf32>
    %20 = vector.multi_reduction <add>, %19, %cst_6 [1] : vector<16x128xf32> to vector<16xf32>
    %21 = vector.shape_cast %20 : vector<16xf32> to vector<16x1xf32>
    %22 = tpu.reciprocal %21 {approx = true} : vector<16x1xf32> -> vector<16x1xf32>
    %23 = vector.broadcast %22 : vector<16x1xf32> to vector<16x128xf32>
    %24 = arith.mulf %19, %23 : vector<16x128xf32>
    %25 = arith.mulf %24, %0 : vector<16x128xf32>
    %26 = arith.addf %0, %25 : vector<16x128xf32>
    %27 = vector.broadcast %3 : vector<1x128xf32> to vector<16x128xf32>
    %28 = arith.mulf %26, %27 : vector<16x128xf32>
    %29 = vector.broadcast %4 : vector<1x128xf32> to vector<16x128xf32>
    %30 = arith.addf %28, %29 : vector<16x128xf32>
    %31 = arith.truncf %30 : vector<16x128xf32> to vector<16x128xbf16>
    %c0_7 = arith.constant 0 : index
    %c0_8 = arith.constant 0 : index
    %32 = vector.load %arg3[%c0_7, %c0_8] : memref<128x128xbf16, #tpu.memory_space<vmem>>, vector<128x128xbf16>
    %cst_9 = arith.constant dense<0.000000e+00> : vector<16x128xf32>
    %33 = tpu.matmul %31, %32, %cst_9 {dimension_numbers = #tpu.dot_dimension_numbers<[1], [0], [0], [1], [0, 0, 1, 1], [], []>} : vector<16x128xbf16>, vector<128x128xbf16>, vector<16x128xf32> -> vector<16x128xf32>
    %34 = vector.broadcast %5 : vector<1x128xf32> to vector<16x128xf32>
    %35 = arith.addf %33, %34 : vector<16x128xf32>
    %cst_10 = arith.constant 0.000000e+00 : f32
    %36 = vector.broadcast %cst_10 : f32 to vector<16x128xf32>
    %37 = arith.maximumf %35, %36 : vector<16x128xf32>
    %38 = arith.truncf %37 : vector<16x128xf32> to vector<16x128xbf16>
    %c0_11 = arith.constant 0 : index
    %c0_12 = arith.constant 0 : index
    %39 = vector.load %arg4[%c0_11, %c0_12] : memref<128x128xbf16, #tpu.memory_space<vmem>>, vector<128x128xbf16>
    %cst_13 = arith.constant dense<0.000000e+00> : vector<16x128xf32>
    %40 = tpu.matmul %38, %39, %cst_13 {dimension_numbers = #tpu.dot_dimension_numbers<[1], [0], [0], [1], [0, 0, 1, 1], [], []>} : vector<16x128xbf16>, vector<128x128xbf16>, vector<16x128xf32> -> vector<16x128xf32>
    %41 = vector.broadcast %6 : vector<1x128xf32> to vector<16x128xf32>
    %42 = arith.addf %40, %41 : vector<16x128xf32>
    %cst_14 = arith.constant 0.000000e+00 : f32
    %43 = vector.broadcast %cst_14 : f32 to vector<16x128xf32>
    %44 = arith.maximumf %42, %43 : vector<16x128xf32>
    %45 = arith.addf %30, %44 : vector<16x128xf32>
    %46 = vector.broadcast %7 : vector<1x128xf32> to vector<16x128xf32>
    %47 = arith.mulf %45, %46 : vector<16x128xf32>
    %48 = vector.broadcast %8 : vector<1x128xf32> to vector<16x128xf32>
    %49 = arith.addf %47, %48 : vector<16x128xf32>
    %50 = arith.truncf %49 : vector<16x128xf32> to vector<16x128xbf16>
    %c0_15 = arith.constant 0 : index
    %c0_16 = arith.constant 0 : index
    %51 = vector.load %arg5[%c0_15, %c0_16] : memref<128x128xbf16, #tpu.memory_space<vmem>>, vector<128x128xbf16>
    %cst_17 = arith.constant dense<0.000000e+00> : vector<16x128xf32>
    %52 = tpu.matmul %50, %51, %cst_17 {dimension_numbers = #tpu.dot_dimension_numbers<[1], [0], [0], [1], [0, 0, 1, 1], [], []>} : vector<16x128xbf16>, vector<128x128xbf16>, vector<16x128xf32> -> vector<16x128xf32>
    %c0_18 = arith.constant 0 : index
    %c0_19 = arith.constant 0 : index
    %53 = vector.load %arg7[%c0_18, %c0_19] : memref<1x128xf32, #tpu.memory_space<vmem>>, vector<1x128xf32>
    %54 = vector.broadcast %53 : vector<1x128xf32> to vector<16x128xf32>
    %55 = arith.addf %52, %54 : vector<16x128xf32>
    %c0_20 = arith.constant 0 : index
    %c0_21 = arith.constant 0 : index
    %56 = vector.load %arg8[%c0_20, %c0_21] : memref<16x128xf32, #tpu.memory_space<vmem>>, vector<16x128xf32>
    tpu.vector_store %arg8[%c0_20, %c0_21], %55 {strides = array<i32>} : memref<16x128xf32, #tpu.memory_space<vmem>>, vector<16x128xf32>,
    return
  }
  func.func @transform_0(%arg0: i32) -> (i32, i32) {
    %c0_i32 = arith.constant 0 : i32
    %c0_i32_0 = arith.constant 0 : i32
    return %arg0, %c0_i32 : i32, i32
  }
  func.func @transform_1(%arg0: i32) -> (i32, i32) {
    %c0_i32 = arith.constant 0 : i32
    %c0_i32_0 = arith.constant 0 : i32
    %c0_i32_1 = arith.constant 0 : i32
    return %c0_i32, %c0_i32_0 : i32, i32
  }
  func.func @transform_2(%arg0: i32) -> (i32, i32) {
    %c0_i32 = arith.constant 0 : i32
    %c0_i32_0 = arith.constant 0 : i32
    %c0_i32_1 = arith.constant 0 : i32
    return %c0_i32, %c0_i32_0 : i32, i32
  }
  func.func @transform_3(%arg0: i32) -> (i32, i32) {
    %c0_i32 = arith.constant 0 : i32
    %c0_i32_0 = arith.constant 0 : i32
    %c0_i32_1 = arith.constant 0 : i32
    return %c0_i32, %c0_i32_0 : i32, i32
  }
  func.func @transform_4(%arg0: i32) -> (i32, i32) {
    %c0_i32 = arith.constant 0 : i32
    %c0_i32_0 = arith.constant 0 : i32
    %c0_i32_1 = arith.constant 0 : i32
    return %c0_i32, %c0_i32_0 : i32, i32
  }
  func.func @transform_5(%arg0: i32) -> (i32, i32) {
    %c0_i32 = arith.constant 0 : i32
    %c0_i32_0 = arith.constant 0 : i32
    %c0_i32_1 = arith.constant 0 : i32
    return %c0_i32, %c0_i32_0 : i32, i32
  }
  func.func @transform_6(%arg0: i32) -> (i32, i32) {
    %c0_i32 = arith.constant 0 : i32
    %c0_i32_0 = arith.constant 0 : i32
    %c0_i32_1 = arith.constant 0 : i32
    return %c0_i32, %c0_i32_0 : i32, i32
  }
  func.func @transform_7(%arg0: i32) -> (i32, i32) {
    %c0_i32 = arith.constant 0 : i32
    %c0_i32_0 = arith.constant 0 : i32
    return %arg0, %c0_i32 : i32, i32
  }
}

module attributes {stable_mosaic.version = 11 : i64} {
  func.func @one_dim_conv_block_kernel(%arg0: i32, %arg1: memref<16x128xf32, #tpu.memory_space<vmem>>, %arg2: memref<128x128xbf16, #tpu.memory_space<vmem>>, %arg3: memref<128x128xbf16, #tpu.memory_space<vmem>>, %arg4: memref<128x128xbf16, #tpu.memory_space<vmem>>, %arg5: memref<128x128xbf16, #tpu.memory_space<vmem>>, %arg6: memref<8x128xf32, #tpu.memory_space<vmem>>, %arg7: memref<1x128xf32, #tpu.memory_space<vmem>>, %arg8: memref<16x128xf32, #tpu.memory_space<vmem>>) attributes {dimension_semantics = [#tpu.dimension_semantics<parallel>], iteration_bounds = array<i64: 1>, scalar_prefetch = 0 : i64, scratch_operands = 0 : i64, tpu.core_type = #tpu.core_type<tc>, window_params = [{transform_indices = @transform_0, window_bounds = array<i64: 16, 128>}, {pipeline_mode = #tpu.pipeline_mode<synchronous>, transform_indices = @transform_1, window_bounds = array<i64: 128, 128>}, {pipeline_mode = #tpu.pipeline_mode<synchronous>, transform_indices = @transform_2, window_bounds = array<i64: 128, 128>}, {pipeline_mode = #tpu.pipeline_mode<synchronous>, transform_indices = @transform_3, window_bounds = array<i64: 128, 128>}, {pipeline_mode = #tpu.pipeline_mode<synchronous>, transform_indices = @transform_4, window_bounds = array<i64: 128, 128>}, {pipeline_mode = #tpu.pipeline_mode<synchronous>, transform_indices = @transform_5, window_bounds = array<i64: 8, 128>}, {pipeline_mode = #tpu.pipeline_mode<synchronous>, transform_indices = @transform_6, window_bounds = array<i64: 1, 128>}, {transform_indices = @transform_7, window_bounds = array<i64: 16, 128>}]} {
    %c0 = arith.constant 0 : index
    %c0_0 = arith.constant 0 : index
    %0 = vector.load %arg1[%c0, %c0_0] : memref<16x128xf32, #tpu.memory_space<vmem>>, vector<16x128xf32>
    %c0_1 = arith.constant 0 : index
    %c0_2 = arith.constant 0 : index
    %1 = vector.load %arg6[%c0_1, %c0_2] : memref<8x128xf32, #tpu.memory_space<vmem>>, vector<8x128xf32>
    %2 = vector.extract_strided_slice %1 {offsets = [0, 0], sizes = [1, 128], strides = [1, 1]} : vector<8x128xf32> to vector<1x128xf32>
    %3 = vector.extract_strided_slice %1 {offsets = [1, 0], sizes = [1, 128], strides = [1, 1]} : vector<8x128xf32> to vector<1x128xf32>
    %4 = vector.extract_strided_slice %1 {offsets = [2, 0], sizes = [1, 128], strides = [1, 1]} : vector<8x128xf32> to vector<1x128xf32>
    %5 = vector.extract_strided_slice %1 {offsets = [3, 0], sizes = [1, 128], strides = [1, 1]} : vector<8x128xf32> to vector<1x128xf32>
    %6 = vector.extract_strided_slice %1 {offsets = [4, 0], sizes = [1, 128], strides = [1, 1]} : vector<8x128xf32> to vector<1x128xf32>
    %7 = vector.extract_strided_slice %1 {offsets = [5, 0], sizes = [1, 128], strides = [1, 1]} : vector<8x128xf32> to vector<1x128xf32>
    %8 = vector.extract_strided_slice %1 {offsets = [6, 0], sizes = [1, 128], strides = [1, 1]} : vector<8x128xf32> to vector<1x128xf32>
    %9 = arith.mulf %0, %0 : vector<16x128xf32>
    %10 = arith.truncf %9 : vector<16x128xf32> to vector<16x128xbf16>
    %c0_3 = arith.constant 0 : index
    %c0_4 = arith.constant 0 : index
    %11 = vector.load %arg2[%c0_3, %c0_4] : memref<128x128xbf16, #tpu.memory_space<vmem>>, vector<128x128xbf16>
    %cst = arith.constant dense<0.000000e+00> : vector<16x128xf32>
    %12 = tpu.matmul %10, %11, %cst {dimension_numbers = #tpu.dot_dimension_numbers<[1], [0], [0], [1], [0, 0, 1, 1], [], []>} : vector<16x128xbf16>, vector<128x128xbf16>, vector<16x128xf32> -> vector<16x128xf32>
    %13 = vector.broadcast %2 : vector<1x128xf32> to vector<16x128xf32>
    %14 = arith.addf %12, %13 : vector<16x128xf32>
    %cst_5 = arith.constant dense<0xFF800000> : vector<16xf32>
    %15 = vector.multi_reduction <maximumf>, %14, %cst_5 [1] : vector<16x128xf32> to vector<16xf32>
    %16 = vector.shape_cast %15 : vector<16xf32> to vector<16x1xf32>
    %17 = vector.broadcast %16 : vector<16x1xf32> to vector<16x128xf32>
    %18 = arith.subf %14, %17 : vector<16x128xf32>
    %19 = math.exp %18 : vector<16x128xf32>
    %cst_6 = arith.constant dense<0.000000e+00> : vector<16xf32>
    %20 = vector.multi_reduction <add>, %19, %cst_6 [1] : vector<16x128xf32> to vector<16xf32>
    %21 = vector.shape_cast %20 : vector<16xf32> to vector<16x1xf32>
    %22 = tpu.reciprocal %21 {approx = true} : vector<16x1xf32> -> vector<16x1xf32>
    %23 = vector.broadcast %22 : vector<16x1xf32> to vector<16x128xf32>
    %24 = arith.mulf %19, %23 : vector<16x128xf32>
    %25 = arith.mulf %24, %0 : vector<16x128xf32>
    %26 = arith.addf %0, %25 : vector<16x128xf32>
    %27 = vector.broadcast %3 : vector<1x128xf32> to vector<16x128xf32>
    %28 = arith.mulf %26, %27 : vector<16x128xf32>
    %29 = vector.broadcast %4 : vector<1x128xf32> to vector<16x128xf32>
    %30 = arith.addf %28, %29 : vector<16x128xf32>
    %31 = arith.truncf %30 : vector<16x128xf32> to vector<16x128xbf16>
    %c0_7 = arith.constant 0 : index
    %c0_8 = arith.constant 0 : index
    %32 = vector.load %arg3[%c0_7, %c0_8] : memref<128x128xbf16, #tpu.memory_space<vmem>>, vector<128x128xbf16>
    %cst_9 = arith.constant dense<0.000000e+00> : vector<16x128xf32>
    %33 = tpu.matmul %31, %32, %cst_9 {dimension_numbers = #tpu.dot_dimension_numbers<[1], [0], [0], [1], [0, 0, 1, 1], [], []>} : vector<16x128xbf16>, vector<128x128xbf16>, vector<16x128xf32> -> vector<16x128xf32>
    %34 = vector.broadcast %5 : vector<1x128xf32> to vector<16x128xf32>
    %35 = arith.addf %33, %34 : vector<16x128xf32>
    %cst_10 = arith.constant 0.000000e+00 : f32
    %36 = vector.broadcast %cst_10 : f32 to vector<16x128xf32>
    %37 = arith.maximumf %35, %36 : vector<16x128xf32>
    %38 = arith.truncf %37 : vector<16x128xf32> to vector<16x128xbf16>
    %c0_11 = arith.constant 0 : index
    %c0_12 = arith.constant 0 : index
    %39 = vector.load %arg4[%c0_11, %c0_12] : memref<128x128xbf16, #tpu.memory_space<vmem>>, vector<128x128xbf16>
    %cst_13 = arith.constant dense<0.000000e+00> : vector<16x128xf32>
    %40 = tpu.matmul %38, %39, %cst_13 {dimension_numbers = #tpu.dot_dimension_numbers<[1], [0], [0], [1], [0, 0, 1, 1], [], []>} : vector<16x128xbf16>, vector<128x128xbf16>, vector<16x128xf32> -> vector<16x128xf32>
    %41 = vector.broadcast %6 : vector<1x128xf32> to vector<16x128xf32>
    %42 = arith.addf %40, %41 : vector<16x128xf32>
    %cst_14 = arith.constant 0.000000e+00 : f32
    %43 = vector.broadcast %cst_14 : f32 to vector<16x128xf32>
    %44 = arith.maximumf %42, %43 : vector<16x128xf32>
    %45 = arith.addf %30, %44 : vector<16x128xf32>
    %46 = vector.broadcast %7 : vector<1x128xf32> to vector<16x128xf32>
    %47 = arith.mulf %45, %46 : vector<16x128xf32>
    %48 = vector.broadcast %8 : vector<1x128xf32> to vector<16x128xf32>
    %49 = arith.addf %47, %48 : vector<16x128xf32>
    %50 = arith.truncf %49 : vector<16x128xf32> to vector<16x128xbf16>
    %c0_15 = arith.constant 0 : index
    %c0_16 = arith.constant 0 : index
    %51 = vector.load %arg5[%c0_15, %c0_16] : memref<128x128xbf16, #tpu.memory_space<vmem>>, vector<128x128xbf16>
    %cst_17 = arith.constant dense<0.000000e+00> : vector<16x128xf32>
    %52 = tpu.matmul %50, %51, %cst_17 {dimension_numbers = #tpu.dot_dimension_numbers<[1], [0], [0], [1], [0, 0, 1, 1], [], []>} : vector<16x128xbf16>, vector<128x128xbf16>, vector<16x128xf32> -> vector<16x128xf32>
    %c0_18 = arith.constant 0 : index
    %c0_19 = arith.constant 0 : index
    %53 = vector.load %arg7[%c0_18, %c0_19] : memref<1x128xf32, #tpu.memory_space<vmem>>, vector<1x128xf32>
    %54 = vector.broadcast %53 : vector<1x128xf32> to vector<16x128xf32>
    %55 = arith.addf %52, %54 : vector<16x128xf32>
    %c0_20 = arith.constant 0 : index
    %c0_21 = arith.constant 0 : index
    %56 = vector.load %arg8[%c0_20, %c0_21] : memref<16x128xf32, #tpu.memory_space<vmem>>, vector<16x128xf32>
    tpu.vector_store %arg8[%c0_20, %c0_21], %55 {strides = array<i32>} : memref<16x128xf32, #tpu.memory_space<vmem>>, vector<16x128xf32>,
    return
  }
  func.func @transform_0(%arg0: i32) -> (i32, i32) {
    %c0_i32 = arith.constant 0 : i32
    %c0_i32_0 = arith.constant 0 : i32
    return %arg0, %c0_i32 : i32, i32
  }
  func.func @transform_1(%arg0: i32) -> (i32, i32) {
    %c0_i32 = arith.constant 0 : i32
    %c0_i32_0 = arith.constant 0 : i32
    %c0_i32_1 = arith.constant 0 : i32
    return %c0_i32, %c0_i32_0 : i32, i32
  }
  func.func @transform_2(%arg0: i32) -> (i32, i32) {
    %c0_i32 = arith.constant 0 : i32
    %c0_i32_0 = arith.constant 0 : i32
    %c0_i32_1 = arith.constant 0 : i32
    return %c0_i32, %c0_i32_0 : i32, i32
  }
  func.func @transform_3(%arg0: i32) -> (i32, i32) {
    %c0_i32 = arith.constant 0 : i32
    %c0_i32_0 = arith.constant 0 : i32
    %c0_i32_1 = arith.constant 0 : i32
    return %c0_i32, %c0_i32_0 : i32, i32
  }
  func.func @transform_4(%arg0: i32) -> (i32, i32) {
    %c0_i32 = arith.constant 0 : i32
    %c0_i32_0 = arith.constant 0 : i32
    %c0_i32_1 = arith.constant 0 : i32
    return %c0_i32, %c0_i32_0 : i32, i32
  }
  func.func @transform_5(%arg0: i32) -> (i32, i32) {
    %c0_i32 = arith.constant 0 : i32
    %c0_i32_0 = arith.constant 0 : i32
    %c0_i32_1 = arith.constant 0 : i32
    return %c0_i32, %c0_i32_0 : i32, i32
  }
  func.func @transform_6(%arg0: i32) -> (i32, i32) {
    %c0_i32 = arith.constant 0 : i32
    %c0_i32_0 = arith.constant 0 : i32
    %c0_i32_1 = arith.constant 0 : i32
    return %c0_i32, %c0_i32_0 : i32, i32
  }
  func.func @transform_7(%arg0: i32) -> (i32, i32) {
    %c0_i32 = arith.constant 0 : i32
    %c0_i32_0 = arith.constant 0 : i32
    return %arg0, %c0_i32 : i32, i32
  }
}

</mosaic_0001>

<llo_original>
// kernel: tpu_custom_call.1
$region0: #{tpu_custom_call.1}
  #allocation0 [shape = 'u32[]', space=smem, size = 0x4, offset = 0x4, fixed_abs, tag = 'smem constant byte address 0x4 - core index']
  #allocation1 [shape = 'u32[144,128]{1,0:T(1,128)}', space=vmem, size = 0x12000, scoped, tag = 'internal scratch']
  %s0 = inlined_call_operand.hbm [shape: f32[16,128], index: 0, kind: input, shape index: {}]
  %s1 = inlined_call_operand.hbm [shape: bf16[128,128], index: 1, kind: input, shape index: {}]
  %s2 = inlined_call_operand.hbm [shape: bf16[128,128], index: 2, kind: input, shape index: {}]
  %s3 = inlined_call_operand.hbm [shape: bf16[128,128], index: 3, kind: input, shape index: {}]
  %s4 = inlined_call_operand.hbm [shape: bf16[128,128], index: 4, kind: input, shape index: {}]
  %s5 = inlined_call_operand.vmem [shape: f32[8,128], index: 5, kind: input, shape index: {}]
  %s6 = inlined_call_operand.vmem [shape: f32[1,128], index: 6, kind: input, shape index: {}]
  %s7 = inlined_call_operand.hbm [shape: f32[16,128], index: 7, kind: output, shape index: {}]
  %s8 = sld [smem:[#allocation0]]
  $region58: #{tpu_custom_call.1} parent=0
    _
  %s10 = ssub.s32 1, %s8
  %s11 = scalar_select 0, %s10, %s8
  $region1: #{tpu_custom_call.1} parent=0
    #allocation2 [shape = 'u8[8192]{0}', space=vmem, size = 0x2000, scoped, tag = 'input window, operand 0, single buffered']
    #allocation3 [shape = 's32[1]{0}', space=sflag, size = 0x4, scoped, tag = 'scoped memory for tpu_custom_call.1']
    #allocation4 [shape = 's32[1]{0}', space=sflag, size = 0x4, scoped, tag = 'scoped memory for tpu_custom_call.1']
    #allocation5 [shape = 'u8[32768]{0}', space=vmem, size = 0x8000, scoped, tag = 'input window, operand 1, single buffered']
    #allocation6 [shape = 's32[1]{0}', space=sflag, size = 0x4, scoped, tag = 'scoped memory for tpu_custom_call.1']
    #allocation7 [shape = 'u8[32768]{0}', space=vmem, size = 0x8000, scoped, tag = 'input window, operand 2, single buffered']
    #allocation8 [shape = 'u8[32768]{0}', space=vmem, size = 0x8000, scoped, tag = 'input window, operand 3, single buffered']
    #allocation9 [shape = 's32[1]{0}', space=sflag, size = 0x4, scoped, tag = 'scoped memory for tpu_custom_call.1']
    #allocation10 [shape = 'u8[32768]{0}', space=vmem, size = 0x8000, scoped, tag = 'input window, operand 4, single buffered']
    #allocation11 [shape = 'u8[8192]{0}', space=vmem, size = 0x2000, scoped, tag = 'output window, operand 0, single buffered']
    %12 = vsyncpa [#allocation3], 0
    %13 = vsyncpa [#allocation6], 0
    %14 = vsyncpa [#allocation9], 0
    %15 = vsyncpa [#allocation4], 0
    // Predicated region
    $region2: #{tpu_custom_call.1} parent=1 // pred_check
      _
    $region3: #{tpu_custom_call.1} parent=1 // pred_check_branch
      %17 = sbr.rel (0) target = $region5
    $region4: #{tpu_custom_call.1} parent=1 // pred_region
      %s19 = ssub.s32 256, 256
      %20 = vsyncadd [#allocation3], %s19
      %s21 = sshll.u32 [#allocation2], 4
      %s22 = int_to_ptr.vmem [resolvable:$true] %s21
      %27 = dma.hbm_to_vmem [thread:$0]  %s0, 256, %s22, [#allocation3], 128, 128, 8
    $region5: #{tpu_custom_call.1} parent=1 // pred_fallthru
      _
    // Predicated region
    $region6: #{tpu_custom_call.1} parent=1 // pred_check
      _
    $region7: #{tpu_custom_call.1} parent=1 // pred_check_branch
      %29 = sbr.rel (0) target = $region9
    $region8: #{tpu_custom_call.1} parent=1 // pred_region
      %s31 = ssub.s32 1024, 1024
      %32 = vsyncadd [#allocation6], %s31
      %s33 = sshll.u32 [#allocation5], 4
      %s34 = int_to_ptr.vmem [resolvable:$true] %s33
      %39 = dma.hbm_to_vmem [thread:$0]  %s1, 1024, %s34, [#allocation6], 64, 64, 4
    $region9: #{tpu_custom_call.1} parent=1 // pred_fallthru
      _
    // Predicated region
    $region10: #{tpu_custom_call.1} parent=1 // pred_check
      _
    $region11: #{tpu_custom_call.1} parent=1 // pred_check_branch
      %41 = sbr.rel (0) target = $region13
    $region12: #{tpu_custom_call.1} parent=1 // pred_region
      %s43 = ssub.s32 1024, 1024
      %44 = vsyncadd [#allocation6], %s43
      %s45 = sshll.u32 [#allocation7], 4
      %s46 = int_to_ptr.vmem [resolvable:$true] %s45
      %51 = dma.hbm_to_vmem [thread:$0]  %s2, 1024, %s46, [#allocation6], 64, 64, 4
    $region13: #{tpu_custom_call.1} parent=1 // pred_fallthru
      _
    // Predicated region
    $region14: #{tpu_custom_call.1} parent=1 // pred_check
      _
    $region15: #{tpu_custom_call.1} parent=1 // pred_check_branch
      %53 = sbr.rel (0) target = $region17
    $region16: #{tpu_custom_call.1} parent=1 // pred_region
      %s55 = ssub.s32 1024, 1024
      %56 = vsyncadd [#allocation9], %s55
      %s57 = sshll.u32 [#allocation8], 4
      %s58 = int_to_ptr.vmem [resolvable:$true] %s57
      %63 = dma.hbm_to_vmem [thread:$0]  %s3, 1024, %s58, [#allocation9], 64, 64, 4
    $region17: #{tpu_custom_call.1} parent=1 // pred_fallthru
      _
    // Predicated region
    $region18: #{tpu_custom_call.1} parent=1 // pred_check
      _
    $region19: #{tpu_custom_call.1} parent=1 // pred_check_branch
      %65 = sbr.rel (0) target = $region21
    $region20: #{tpu_custom_call.1} parent=1 // pred_region
      %s67 = ssub.s32 1024, 1024
      %68 = vsyncadd [#allocation9], %s67
      %s69 = sshll.u32 [#allocation10], 4
      %s70 = int_to_ptr.vmem [resolvable:$true] %s69
      %75 = dma.hbm_to_vmem [thread:$0]  %s4, 1024, %s70, [#allocation9], 64, 64, 4
    $region21: #{tpu_custom_call.1} parent=1 // pred_fallthru
      _
    // Predicated region
    $region22: #{tpu_custom_call.1} parent=1 // pred_check
      _
    $region23: #{tpu_custom_call.1} parent=1 // pred_check_branch
      %77 = sbr.rel (0) target = $region25
    $region24: #{tpu_custom_call.1} parent=1 // pred_region
      _
    $region25: #{tpu_custom_call.1} parent=1 // pred_fallthru
      _
    // Predicated region
    $region26: #{tpu_custom_call.1} parent=1 // pred_check
      _
    $region27: #{tpu_custom_call.1} parent=1 // pred_check_branch
      %79 = sbr.rel (0) target = $region29
    $region28: #{tpu_custom_call.1} parent=1 // pred_region
      _
    $region29: #{tpu_custom_call.1} parent=1 // pred_fallthru
      _
    // Predicated region
    $region30: #{tpu_custom_call.1} parent=1 // pred_check
      _
    $region31: #{tpu_custom_call.1} parent=1 // pred_check_branch
      %81 = sbr.rel (0) target = $region33
    $region32: #{tpu_custom_call.1} parent=1 // pred_region
      %82 = dma.done [#allocation3], 256
    $region33: #{tpu_custom_call.1} parent=1 // pred_fallthru
      _
    // Predicated region
    $region34: #{tpu_custom_call.1} parent=1 // pred_check
      _
    $region35: #{tpu_custom_call.1} parent=1 // pred_check_branch
      %84 = sbr.rel (0) target = $region37
    $region36: #{tpu_custom_call.1} parent=1 // pred_region
      %85 = dma.done [#allocation6], 1024
    $region37: #{tpu_custom_call.1} parent=1 // pred_fallthru
      _
    // Predicated region
    $region38: #{tpu_custom_call.1} parent=1 // pred_check
      _
    $region39: #{tpu_custom_call.1} parent=1 // pred_check_branch
      %87 = sbr.rel (0) target = $region41
    $region40: #{tpu_custom_call.1} parent=1 // pred_region
      %88 = dma.done [#allocation6], 1024
    $region41: #{tpu_custom_call.1} parent=1 // pred_fallthru
      _
    // Predicated region
    $region42: #{tpu_custom_call.1} parent=1 // pred_check
      _
    $region43: #{tpu_custom_call.1} parent=1 // pred_check_branch
      %90 = sbr.rel (0) target = $region45
    $region44: #{tpu_custom_call.1} parent=1 // pred_region
      %91 = dma.done [#allocation9], 1024
    $region45: #{tpu_custom_call.1} parent=1 // pred_fallthru
      _
    // Predicated region
    $region46: #{tpu_custom_call.1} parent=1 // pred_check
      _
    $region47: #{tpu_custom_call.1} parent=1 // pred_check_branch
      %93 = sbr.rel (0) target = $region49
    $region48: #{tpu_custom_call.1} parent=1 // pred_region
      %94 = dma.done [#allocation9], 1024
    $region49: #{tpu_custom_call.1} parent=1 // pred_fallthru
      _
    %v96 = vld [vmem:[#allocation2] sm:$0xff]
    %v97 = vld [vmem:[#allocation2 + $0x8] sm:$0xff]
    %v98 = vld [vmem:[%s5] sm:$0xff]
    %v99 = vmul.f32 %v96, %v96
    %v100 = vmul.f32 %v97, %v97
    %v101 = vpack.c.bf16 %v100, %v99
    %v102 = vld [vmem:[#allocation5] sm:$0xf]
    %v103 = vld [vmem:[#allocation5 + $0x4] sm:$0xf]
    %v104 = vld [vmem:[#allocation5 + $0x8] sm:$0xf]
    %v105 = vld [vmem:[#allocation5 + $0xc] sm:$0xf]
    %v106 = vld [vmem:[#allocation5 + $0x10] sm:$0xf]
    %v107 = vld [vmem:[#allocation5 + $0x14] sm:$0xf]
    %v108 = vld [vmem:[#allocation5 + $0x18] sm:$0xf]
    %v109 = vld [vmem:[#allocation5 + $0x1c] sm:$0xf]
    %v110 = vld [vmem:[#allocation5 + $0x20] sm:$0xf]
    %v111 = vld [vmem:[#allocation5 + $0x24] sm:$0xf]
    %v112 = vld [vmem:[#allocation5 + $0x28] sm:$0xf]
    %v113 = vld [vmem:[#allocation5 + $0x2c] sm:$0xf]
    %v114 = vld [vmem:[#allocation5 + $0x30] sm:$0xf]
    %v115 = vld [vmem:[#allocation5 + $0x34] sm:$0xf]
    %v116 = vld [vmem:[#allocation5 + $0x38] sm:$0xf]
    %v117 = vld [vmem:[#allocation5 + $0x3c] sm:$0xf]
    %v118 = vlaneseq
    %v119 = vshrl.u32 %v118, 7
    %v120 = vsub.s32 0, %v119
    %v121 = vrot.slane %v98, %v120
    %v138 = vunpack.c.l.b16 %v102
    %v139 = vunpack.c.l.b16 %v103
    %v140 = vunpack.c.l.b16 %v104
    %v141 = vunpack.c.l.b16 %v105
    %v142 = vunpack.c.l.b16 %v106
    %v143 = vunpack.c.l.b16 %v107
    %v144 = vunpack.c.l.b16 %v108
    %v145 = vunpack.c.l.b16 %v109
    %v146 = vunpack.c.l.b16 %v110
    %v147 = vunpack.c.l.b16 %v111
    %v148 = vunpack.c.l.b16 %v112
    %v149 = vunpack.c.l.b16 %v113
    %v150 = vunpack.c.l.b16 %v114
    %v151 = vunpack.c.l.b16 %v115
    %v152 = vunpack.c.l.b16 %v116
    %v153 = vunpack.c.l.b16 %v117
    %v154 = vpack.c.b16 %v139, %v138
    %v155 = vpack.c.b16 %v141, %v140
    %v156 = vpack.c.b16 %v143, %v142
    %v157 = vpack.c.b16 %v145, %v144
    %v158 = vpack.c.b16 %v147, %v146
    %v159 = vpack.c.b16 %v149, %v148
    %v160 = vpack.c.b16 %v151, %v150
    %v161 = vpack.c.b16 %v153, %v152
    %170 = vmatprep.subr.bf16.mxu0 0
    %171 = vmatpush1.bf16.msra.mxu0 %v154
    %172 = vmatprep.subr.bf16.mxu0 0
    %173 = vmatpush1.bf16.msra.mxu0 %v155
    %174 = vmatprep.subr.bf16.mxu0 0
    %175 = vmatpush1.bf16.msra.mxu0 %v156
    %176 = vmatprep.subr.bf16.mxu0 0
    %177 = vmatpush1.bf16.msra.mxu0 %v157
    %178 = vmatprep.subr.bf16.mxu0 0
    %179 = vmatpush1.bf16.msra.mxu0 %v158
    %180 = vmatprep.subr.bf16.mxu0 0
    %181 = vmatpush1.bf16.msra.mxu0 %v159
    %182 = vmatprep.subr.bf16.mxu0 0
    %183 = vmatpush1.bf16.msra.mxu0 %v160
    %184 = vmatprep.subr.bf16.mxu0 0
    %185 = vmatpush1.bf16.msra.mxu0 %v161
    %186 = vmatprep.subr.bf16.mxu0 0
    %187 = vmatpush1.bf16.msra.mxu0 0
    %188 = vmatprep.subr.bf16.mxu0 0
    %189 = vmatpush1.bf16.msra.mxu0 0
    %190 = vmatprep.subr.bf16.mxu0 0
    %191 = vmatpush1.bf16.msra.mxu0 0
    %192 = vmatprep.subr.bf16.mxu0 0
    %193 = vmatpush1.bf16.msra.mxu0 0
    %194 = vmatprep.subr.bf16.mxu0 0
    %195 = vmatpush1.bf16.msra.mxu0 0
    %196 = vmatprep.subr.bf16.mxu0 0
    %197 = vmatpush1.bf16.msra.mxu0 0
    %198 = vmatprep.subr.bf16.mxu0 0
    %199 = vmatpush1.bf16.msra.mxu0 0
    %200 = vmatprep.subr.bf16.mxu0 0
    %201 = vmatpush1.bf16.msra.mxu0 0
    %202 = vmatprep.mubr.bf16.mxu0 0
    %203 = vmatmul.mubr.bf16.gmra.mrb[0].mxu0 %v101
    %v204 = vpop.f32.mrb[0].mxu0
    %v205 = vadd.f32 %v121, %v204
    %v206 = vpop.f32.mrb[0].mxu0
    %v207 = vpop.f32.mrb[0].mxu0
    %v208 = vadd.f32 %v121, %v207
    %v209 = vpop.f32.mrb[0].mxu0
    %210 = vdwg.mxu0
    %211 = vmax.xlane.f32.xlu0 %v205
    %v212 = vpop.xlane.xlu0 %211
    %213 = vmax.xlane.f32.xlu0 %v208
    %v214 = vpop.xlane.xlu0 %213
    %v215 = vsub.f32 %v205, %v212
    %v216 = vsub.f32 %v208, %v214
    %v217 = vmul.f32 %v215, 1.442695
    %v218 = vpow.pop %v217
    %v219 = vmul.f32 %v216, 1.442695
    %v220 = vpow.pop %v219
    %221 = vadd.xlane.f32.xlu0 %v218
    %v222 = vpop.xlane.xlu0 %221
    %223 = vadd.xlane.f32.xlu0 %v220
    %v224 = vpop.xlane.xlu0 %223
    %v225 = vrcp.pop %v222
    %v226 = vrcp.pop %v224
    %v227 = vmul.f32 %v218, %v225
    %v228 = vmul.f32 %v220, %v226
    %v229 = vmul.f32 %v227, %v96
    %v230 = vmul.f32 %v228, %v97
    %v231 = vadd.f32 %v96, %v229
    %v232 = vadd.f32 %v97, %v230
    %v233 = vlaneseq
    %v234 = vshrl.u32 %v233, 7
    %v235 = vsub.s32 1, %v234
    %v236 = vrot.slane %v98, %v235
    %v237 = vmul.f32 %v231, %v236
    %v238 = vmul.f32 %v232, %v236
    %v239 = vlaneseq
    %v240 = vshrl.u32 %v239, 7
    %v241 = vsub.s32 2, %v240
    %v242 = vrot.slane %v98, %v241
    %v243 = vadd.f32 %v237, %v242
    %v244 = vadd.f32 %v238, %v242
    %v245 = vpack.c.bf16 %v244, %v243
    %v246 = vld [vmem:[#allocation7] sm:$0xf]
    %v247 = vld [vmem:[#allocation7 + $0x4] sm:$0xf]
    %v248 = vld [vmem:[#allocation7 + $0x8] sm:$0xf]
    %v249 = vld [vmem:[#allocation7 + $0xc] sm:$0xf]
    %v250 = vld [vmem:[#allocation7 + $0x10] sm:$0xf]
    %v251 = vld [vmem:[#allocation7 + $0x14] sm:$0xf]
    %v252 = vld [vmem:[#allocation7 + $0x18] sm:$0xf]
    %v253 = vld [vmem:[#allocation7 + $0x1c] sm:$0xf]
    %v254 = vld [vmem:[#allocation7 + $0x20] sm:$0xf]
    %v255 = vld [vmem:[#allocation7 + $0x24] sm:$0xf]
    %v256 = vld [vmem:[#allocation7 + $0x28] sm:$0xf]
    %v257 = vld [vmem:[#allocation7 + $0x2c] sm:$0xf]
    %v258 = vld [vmem:[#allocation7 + $0x30] sm:$0xf]
    %v259 = vld [vmem:[#allocation7 + $0x34] sm:$0xf]
    %v260 = vld [vmem:[#allocation7 + $0x38] sm:$0xf]
    %v261 = vld [vmem:[#allocation7 + $0x3c] sm:$0xf]
    %v262 = vlaneseq
    %v263 = vshrl.u32 %v262, 7
    %v264 = vsub.s32 3, %v263
    %v265 = vrot.slane %v98, %v264
    %v282 = vunpack.c.l.b16 %v246
    %v283 = vunpack.c.l.b16 %v247
    %v284 = vunpack.c.l.b16 %v248
    %v285 = vunpack.c.l.b16 %v249
    %v286 = vunpack.c.l.b16 %v250
    %v287 = vunpack.c.l.b16 %v251
    %v288 = vunpack.c.l.b16 %v252
    %v289 = vunpack.c.l.b16 %v253
    %v290 = vunpack.c.l.b16 %v254
    %v291 = vunpack.c.l.b16 %v255
    %v292 = vunpack.c.l.b16 %v256
    %v293 = vunpack.c.l.b16 %v257
    %v294 = vunpack.c.l.b16 %v258
    %v295 = vunpack.c.l.b16 %v259
    %v296 = vunpack.c.l.b16 %v260
    %v297 = vunpack.c.l.b16 %v261
    %v298 = vpack.c.b16 %v283, %v282
    %v299 = vpack.c.b16 %v285, %v284
    %v300 = vpack.c.b16 %v287, %v286
    %v301 = vpack.c.b16 %v289, %v288
    %v302 = vpack.c.b16 %v291, %v290
    %v303 = vpack.c.b16 %v293, %v292
    %v304 = vpack.c.b16 %v295, %v294
    %v305 = vpack.c.b16 %v297, %v296
    %314 = vmatprep.subr.bf16.mxu0 0
    %315 = vmatpush1.bf16.msra.mxu0 %v298
    %316 = vmatprep.subr.bf16.mxu0 0
    %317 = vmatpush1.bf16.msra.mxu0 %v299
    %318 = vmatprep.subr.bf16.mxu0 0
    %319 = vmatpush1.bf16.msra.mxu0 %v300
    %320 = vmatprep.subr.bf16.mxu0 0
    %321 = vmatpush1.bf16.msra.mxu0 %v301
    %322 = vmatprep.subr.bf16.mxu0 0
    %323 = vmatpush1.bf16.msra.mxu0 %v302
    %324 = vmatprep.subr.bf16.mxu0 0
    %325 = vmatpush1.bf16.msra.mxu0 %v303
    %326 = vmatprep.subr.bf16.mxu0 0
    %327 = vmatpush1.bf16.msra.mxu0 %v304
    %328 = vmatprep.subr.bf16.mxu0 0
    %329 = vmatpush1.bf16.msra.mxu0 %v305
    %330 = vmatprep.subr.bf16.mxu0 0
    %331 = vmatpush1.bf16.msra.mxu0 0
    %332 = vmatprep.subr.bf16.mxu0 0
    %333 = vmatpush1.bf16.msra.mxu0 0
    %334 = vmatprep.subr.bf16.mxu0 0
    %335 = vmatpush1.bf16.msra.mxu0 0
    %336 = vmatprep.subr.bf16.mxu0 0
    %337 = vmatpush1.bf16.msra.mxu0 0
    %338 = vmatprep.subr.bf16.mxu0 0
    %339 = vmatpush1.bf16.msra.mxu0 0
    %340 = vmatprep.subr.bf16.mxu0 0
    %341 = vmatpush1.bf16.msra.mxu0 0
    %342 = vmatprep.subr.bf16.mxu0 0
    %343 = vmatpush1.bf16.msra.mxu0 0
    %344 = vmatprep.subr.bf16.mxu0 0
    %345 = vmatpush1.bf16.msra.mxu0 0
    %346 = vmatprep.mubr.bf16.mxu0 0
    %347 = vmatmul.mubr.bf16.gmra.mrb[0].mxu0 %v245
    %v348 = vpop.f32.mrb[0].mxu0
    %v349 = vadd.f32 %v265, %v348
    %v350 = vpop.f32.mrb[0].mxu0
    %v351 = vpop.f32.mrb[0].mxu0
    %v352 = vadd.f32 %v265, %v351
    %v353 = vpop.f32.mrb[0].mxu0
    %354 = vdwg.mxu0
    %v355 = vmax.f32 %v349, 0.0
    %v356 = vmax.f32 %v352, 0.0
    %v357 = vpack.c.bf16 %v356, %v355
    %v358 = vld [vmem:[#allocation8] sm:$0xf]
    %v359 = vld [vmem:[#allocation8 + $0x4] sm:$0xf]
    %v360 = vld [vmem:[#allocation8 + $0x8] sm:$0xf]
    %v361 = vld [vmem:[#allocation8 + $0xc] sm:$0xf]
    %v362 = vld [vmem:[#allocation8 + $0x10] sm:$0xf]
    %v363 = vld [vmem:[#allocation8 + $0x14] sm:$0xf]
    %v364 = vld [vmem:[#allocation8 + $0x18] sm:$0xf]
    %v365 = vld [vmem:[#allocation8 + $0x1c] sm:$0xf]
    %v366 = vld [vmem:[#allocation8 + $0x20] sm:$0xf]
    %v367 = vld [vmem:[#allocation8 + $0x24] sm:$0xf]
    %v368 = vld [vmem:[#allocation8 + $0x28] sm:$0xf]
    %v369 = vld [vmem:[#allocation8 + $0x2c] sm:$0xf]
    %v370 = vld [vmem:[#allocation8 + $0x30] sm:$0xf]
    %v371 = vld [vmem:[#allocation8 + $0x34] sm:$0xf]
    %v372 = vld [vmem:[#allocation8 + $0x38] sm:$0xf]
    %v373 = vld [vmem:[#allocation8 + $0x3c] sm:$0xf]
    %v374 = vlaneseq
    %v375 = vshrl.u32 %v374, 7
    %v376 = vsub.s32 4, %v375
    %v377 = vrot.slane %v98, %v376
    %v394 = vunpack.c.l.b16 %v358
    %v395 = vunpack.c.l.b16 %v359
    %v396 = vunpack.c.l.b16 %v360
    %v397 = vunpack.c.l.b16 %v361
    %v398 = vunpack.c.l.b16 %v362
    %v399 = vunpack.c.l.b16 %v363
    %v400 = vunpack.c.l.b16 %v364
    %v401 = vunpack.c.l.b16 %v365
    %v402 = vunpack.c.l.b16 %v366
    %v403 = vunpack.c.l.b16 %v367
    %v404 = vunpack.c.l.b16 %v368
    %v405 = vunpack.c.l.b16 %v369
    %v406 = vunpack.c.l.b16 %v370
    %v407 = vunpack.c.l.b16 %v371
    %v408 = vunpack.c.l.b16 %v372
    %v409 = vunpack.c.l.b16 %v373
    %v410 = vpack.c.b16 %v395, %v394
    %v411 = vpack.c.b16 %v397, %v396
    %v412 = vpack.c.b16 %v399, %v398
    %v413 = vpack.c.b16 %v401, %v400
    %v414 = vpack.c.b16 %v403, %v402
    %v415 = vpack.c.b16 %v405, %v404
    %v416 = vpack.c.b16 %v407, %v406
    %v417 = vpack.c.b16 %v409, %v408
    %426 = vmatprep.subr.bf16.mxu0 0
    %427 = vmatpush1.bf16.msra.mxu0 %v410
    %428 = vmatprep.subr.bf16.mxu0 0
    %429 = vmatpush1.bf16.msra.mxu0 %v411
    %430 = vmatprep.subr.bf16.mxu0 0
    %431 = vmatpush1.bf16.msra.mxu0 %v412
    %432 = vmatprep.subr.bf16.mxu0 0
    %433 = vmatpush1.bf16.msra.mxu0 %v413
    %434 = vmatprep.subr.bf16.mxu0 0
    %435 = vmatpush1.bf16.msra.mxu0 %v414
    %436 = vmatprep.subr.bf16.mxu0 0
    %437 = vmatpush1.bf16.msra.mxu0 %v415
    %438 = vmatprep.subr.bf16.mxu0 0
    %439 = vmatpush1.bf16.msra.mxu0 %v416
    %440 = vmatprep.subr.bf16.mxu0 0
    %441 = vmatpush1.bf16.msra.mxu0 %v417
    %442 = vmatprep.subr.bf16.mxu0 0
    %443 = vmatpush1.bf16.msra.mxu0 0
    %444 = vmatprep.subr.bf16.mxu0 0
    %445 = vmatpush1.bf16.msra.mxu0 0
    %446 = vmatprep.subr.bf16.mxu0 0
    %447 = vmatpush1.bf16.msra.mxu0 0
    %448 = vmatprep.subr.bf16.mxu0 0
    %449 = vmatpush1.bf16.msra.mxu0 0
    %450 = vmatprep.subr.bf16.mxu0 0
    %451 = vmatpush1.bf16.msra.mxu0 0
    %452 = vmatprep.subr.bf16.mxu0 0
    %453 = vmatpush1.bf16.msra.mxu0 0
    %454 = vmatprep.subr.bf16.mxu0 0
    %455 = vmatpush1.bf16.msra.mxu0 0
    %456 = vmatprep.subr.bf16.mxu0 0
    %457 = vmatpush1.bf16.msra.mxu0 0
    %458 = vmatprep.mubr.bf16.mxu0 0
    %459 = vmatmul.mubr.bf16.gmra.mrb[0].mxu0 %v357
    %v460 = vpop.f32.mrb[0].mxu0
    %v461 = vadd.f32 %v377, %v460
    %v462 = vpop.f32.mrb[0].mxu0
    %v463 = vpop.f32.mrb[0].mxu0
    %v464 = vadd.f32 %v377, %v463
    %v465 = vpop.f32.mrb[0].mxu0
    %466 = vdwg.mxu0
    %v467 = vmax.f32 %v461, 0.0
    %v468 = vmax.f32 %v464, 0.0
    %v469 = vadd.f32 %v243, %v467
    %v470 = vadd.f32 %v244, %v468
    %v471 = vlaneseq
    %v472 = vshrl.u32 %v471, 7
    %v473 = vsub.s32 5, %v472
    %v474 = vrot.slane %v98, %v473
    %v475 = vmul.f32 %v469, %v474
    %v476 = vmul.f32 %v470, %v474
    %v477 = vlaneseq
    %v478 = vshrl.u32 %v477, 7
    %v479 = vsub.s32 6, %v478
    %v480 = vrot.slane %v98, %v479
    %v481 = vadd.f32 %v475, %v480
    %v482 = vadd.f32 %v476, %v480
    %v483 = vpack.c.bf16 %v482, %v481
    %v484 = vld [vmem:[#allocation10] sm:$0xf]
    %v485 = vld [vmem:[#allocation10 + $0x4] sm:$0xf]
    %v486 = vld [vmem:[#allocation10 + $0x8] sm:$0xf]
    %v487 = vld [vmem:[#allocation10 + $0xc] sm:$0xf]
    %v488 = vld [vmem:[#allocation10 + $0x10] sm:$0xf]
    %v489 = vld [vmem:[#allocation10 + $0x14] sm:$0xf]
    %v490 = vld [vmem:[#allocation10 + $0x18] sm:$0xf]
    %v491 = vld [vmem:[#allocation10 + $0x1c] sm:$0xf]
    %v492 = vld [vmem:[#allocation10 + $0x20] sm:$0xf]
    %v493 = vld [vmem:[#allocation10 + $0x24] sm:$0xf]
    %v494 = vld [vmem:[#allocation10 + $0x28] sm:$0xf]
    %v495 = vld [vmem:[#allocation10 + $0x2c] sm:$0xf]
    %v496 = vld [vmem:[#allocation10 + $0x30] sm:$0xf]
    %v497 = vld [vmem:[#allocation10 + $0x34] sm:$0xf]
    %v498 = vld [vmem:[#allocation10 + $0x38] sm:$0xf]
    %v499 = vld [vmem:[#allocation10 + $0x3c] sm:$0xf]
    %v500 = vld [vmem:[%s6] sm:$0x1]
    %v502 = vlaneseq
    %v503 = vshrl.u32 %v502, 7
    %v504 = vsub.s32 0, %v503
    %v505 = vrot.slane %v500, %v504
    %v523 = vunpack.c.l.b16 %v484
    %v524 = vunpack.c.l.b16 %v485
    %v525 = vunpack.c.l.b16 %v486
    %v526 = vunpack.c.l.b16 %v487
    %v527 = vunpack.c.l.b16 %v488
    %v528 = vunpack.c.l.b16 %v489
    %v529 = vunpack.c.l.b16 %v490
    %v530 = vunpack.c.l.b16 %v491
    %v531 = vunpack.c.l.b16 %v492
    %v532 = vunpack.c.l.b16 %v493
    %v533 = vunpack.c.l.b16 %v494
    %v534 = vunpack.c.l.b16 %v495
    %v535 = vunpack.c.l.b16 %v496
    %v536 = vunpack.c.l.b16 %v497
    %v537 = vunpack.c.l.b16 %v498
    %v538 = vunpack.c.l.b16 %v499
    %v539 = vpack.c.b16 %v524, %v523
    %v540 = vpack.c.b16 %v526, %v525
    %v541 = vpack.c.b16 %v528, %v527
    %v542 = vpack.c.b16 %v530, %v529
    %v543 = vpack.c.b16 %v532, %v531
    %v544 = vpack.c.b16 %v534, %v533
    %v545 = vpack.c.b16 %v536, %v535
    %v546 = vpack.c.b16 %v538, %v537
    %555 = vmatprep.subr.bf16.mxu0 0
    %556 = vmatpush1.bf16.msra.mxu0 %v539
    %557 = vmatprep.subr.bf16.mxu0 0
    %558 = vmatpush1.bf16.msra.mxu0 %v540
    %559 = vmatprep.subr.bf16.mxu0 0
    %560 = vmatpush1.bf16.msra.mxu0 %v541
    %561 = vmatprep.subr.bf16.mxu0 0
    %562 = vmatpush1.bf16.msra.mxu0 %v542
    %563 = vmatprep.subr.bf16.mxu0 0
    %564 = vmatpush1.bf16.msra.mxu0 %v543
    %565 = vmatprep.subr.bf16.mxu0 0
    %566 = vmatpush1.bf16.msra.mxu0 %v544
    %567 = vmatprep.subr.bf16.mxu0 0
    %568 = vmatpush1.bf16.msra.mxu0 %v545
    %569 = vmatprep.subr.bf16.mxu0 0
    %570 = vmatpush1.bf16.msra.mxu0 %v546
    %571 = vmatprep.subr.bf16.mxu0 0
    %572 = vmatpush1.bf16.msra.mxu0 0
    %573 = vmatprep.subr.bf16.mxu0 0
    %574 = vmatpush1.bf16.msra.mxu0 0
    %575 = vmatprep.subr.bf16.mxu0 0
    %576 = vmatpush1.bf16.msra.mxu0 0
    %577 = vmatprep.subr.bf16.mxu0 0
    %578 = vmatpush1.bf16.msra.mxu0 0
    %579 = vmatprep.subr.bf16.mxu0 0
    %580 = vmatpush1.bf16.msra.mxu0 0
    %581 = vmatprep.subr.bf16.mxu0 0
    %582 = vmatpush1.bf16.msra.mxu0 0
    %583 = vmatprep.subr.bf16.mxu0 0
    %584 = vmatpush1.bf16.msra.mxu0 0
    %585 = vmatprep.subr.bf16.mxu0 0
    %586 = vmatpush1.bf16.msra.mxu0 0
    %587 = vmatprep.mubr.bf16.mxu0 0
    %588 = vmatmul.mubr.bf16.gmra.mrb[0].mxu0 %v483
    %v589 = vpop.f32.mrb[0].mxu0
    %v590 = vadd.f32 %v505, %v589
    %v591 = vpop.f32.mrb[0].mxu0
    %v592 = vpop.f32.mrb[0].mxu0
    %v593 = vadd.f32 %v505, %v592
    %v594 = vpop.f32.mrb[0].mxu0
    %595 = vdwg.mxu0
    %596 = vst [vmem:[#allocation11] sm:$0xff] %v590
    %597 = vst [vmem:[#allocation11 + $0x8] sm:$0xff] %v593
    // Predicated region
    $region50: #{tpu_custom_call.1} parent=1 // pred_check
      _
    $region51: #{tpu_custom_call.1} parent=1 // pred_check_branch
      %599 = sbr.rel (0) target = $region53
    $region52: #{tpu_custom_call.1} parent=1 // pred_region
      %s601 = ssub.s32 256, 256
      %602 = vsyncadd [#allocation4], %s601
      %s603 = sshll.u32 [#allocation11], 4
      %s604 = int_to_ptr.vmem [resolvable:$true] %s603
      %609 = dma.vmem_to_hbm [thread:$0]  %s604, 256, %s7, [#allocation4], 128, 128, 8
    $region53: #{tpu_custom_call.1} parent=1 // pred_fallthru
      _
    // Predicated region
    $region54: #{tpu_custom_call.1} parent=1 // pred_check
      _
    $region55: #{tpu_custom_call.1} parent=1 // pred_check_branch
      %611 = sbr.rel (0) target = $region57
    $region56: #{tpu_custom_call.1} parent=1 // pred_region
      %612 = dma.done [#allocation4], 256
    $region57: #{tpu_custom_call.1} parent=1 // pred_fallthru
      _
    %613 = vsyncpa [#allocation3], 1
    %614 = vsyncpa [#allocation6], 1
    %615 = vsyncpa [#allocation9], 1
    %616 = vsyncpa [#allocation4], 1

// kernel: tpu_custom_call.1
$region0: #{tpu_custom_call.1}
  #allocation0 [shape = 'u32[]', space=smem, size = 0x4, offset = 0x4, fixed_abs, tag = 'smem constant byte address 0x4 - core index']
  #allocation1 [shape = 'u32[144,128]{1,0:T(1,128)}', space=vmem, size = 0x12000, scoped, tag = 'internal scratch']
  %s0 = inlined_call_operand.hbm [shape: f32[16,128], index: 0, kind: input, shape index: {}]
  %s1 = inlined_call_operand.hbm [shape: bf16[128,128], index: 1, kind: input, shape index: {}]
  %s2 = inlined_call_operand.hbm [shape: bf16[128,128], index: 2, kind: input, shape index: {}]
  %s3 = inlined_call_operand.hbm [shape: bf16[128,128], index: 3, kind: input, shape index: {}]
  %s4 = inlined_call_operand.hbm [shape: bf16[128,128], index: 4, kind: input, shape index: {}]
  %s5 = inlined_call_operand.vmem [shape: f32[8,128], index: 5, kind: input, shape index: {}]
  %s6 = inlined_call_operand.vmem [shape: f32[1,128], index: 6, kind: input, shape index: {}]
  %s7 = inlined_call_operand.hbm [shape: f32[16,128], index: 7, kind: output, shape index: {}]
  %s8 = sld [smem:[#allocation0]]
  $region58: #{tpu_custom_call.1} parent=0
    _
  %s10 = ssub.s32 1, %s8
  %s11 = scalar_select 0, %s10, %s8
  $region1: #{tpu_custom_call.1} parent=0
    #allocation2 [shape = 'u8[8192]{0}', space=vmem, size = 0x2000, scoped, tag = 'input window, operand 0, single buffered']
    #allocation3 [shape = 's32[1]{0}', space=sflag, size = 0x4, scoped, tag = 'scoped memory for tpu_custom_call.1']
    #allocation4 [shape = 's32[1]{0}', space=sflag, size = 0x4, scoped, tag = 'scoped memory for tpu_custom_call.1']
    #allocation5 [shape = 'u8[32768]{0}', space=vmem, size = 0x8000, scoped, tag = 'input window, operand 1, single buffered']
    #allocation6 [shape = 's32[1]{0}', space=sflag, size = 0x4, scoped, tag = 'scoped memory for tpu_custom_call.1']
    #allocation7 [shape = 'u8[32768]{0}', space=vmem, size = 0x8000, scoped, tag = 'input window, operand 2, single buffered']
    #allocation8 [shape = 'u8[32768]{0}', space=vmem, size = 0x8000, scoped, tag = 'input window, operand 3, single buffered']
    #allocation9 [shape = 's32[1]{0}', space=sflag, size = 0x4, scoped, tag = 'scoped memory for tpu_custom_call.1']
    #allocation10 [shape = 'u8[32768]{0}', space=vmem, size = 0x8000, scoped, tag = 'input window, operand 4, single buffered']
    #allocation11 [shape = 'u8[8192]{0}', space=vmem, size = 0x2000, scoped, tag = 'output window, operand 0, single buffered']
    %12 = vsyncpa [#allocation3], 0
    %13 = vsyncpa [#allocation6], 0
    %14 = vsyncpa [#allocation9], 0
    %15 = vsyncpa [#allocation4], 0
    // Predicated region
    $region2: #{tpu_custom_call.1} parent=1 // pred_check
      _
    $region3: #{tpu_custom_call.1} parent=1 // pred_check_branch
      %17 = sbr.rel (0) target = $region5
    $region4: #{tpu_custom_call.1} parent=1 // pred_region
      %s19 = ssub.s32 256, 256
      %20 = vsyncadd [#allocation3], %s19
      %s21 = sshll.u32 [#allocation2], 4
      %s22 = int_to_ptr.vmem [resolvable:$true] %s21
      %27 = dma.hbm_to_vmem [thread:$0]  %s0, 256, %s22, [#allocation3], 128, 128, 8
    $region5: #{tpu_custom_call.1} parent=1 // pred_fallthru
      _
    // Predicated region
    $region6: #{tpu_custom_call.1} parent=1 // pred_check
      _
    $region7: #{tpu_custom_call.1} parent=1 // pred_check_branch
      %29 = sbr.rel (0) target = $region9
    $region8: #{tpu_custom_call.1} parent=1 // pred_region
      %s31 = ssub.s32 1024, 1024
      %32 = vsyncadd [#allocation6], %s31
      %s33 = sshll.u32 [#allocation5], 4
      %s34 = int_to_ptr.vmem [resolvable:$true] %s33
      %39 = dma.hbm_to_vmem [thread:$0]  %s1, 1024, %s34, [#allocation6], 64, 64, 4
    $region9: #{tpu_custom_call.1} parent=1 // pred_fallthru
      _
    // Predicated region
    $region10: #{tpu_custom_call.1} parent=1 // pred_check
      _
    $region11: #{tpu_custom_call.1} parent=1 // pred_check_branch
      %41 = sbr.rel (0) target = $region13
    $region12: #{tpu_custom_call.1} parent=1 // pred_region
      %s43 = ssub.s32 1024, 1024
      %44 = vsyncadd [#allocation6], %s43
      %s45 = sshll.u32 [#allocation7], 4
      %s46 = int_to_ptr.vmem [resolvable:$true] %s45
      %51 = dma.hbm_to_vmem [thread:$0]  %s2, 1024, %s46, [#allocation6], 64, 64, 4
    $region13: #{tpu_custom_call.1} parent=1 // pred_fallthru
      _
    // Predicated region
    $region14: #{tpu_custom_call.1} parent=1 // pred_check
      _
    $region15: #{tpu_custom_call.1} parent=1 // pred_check_branch
      %53 = sbr.rel (0) target = $region17
    $region16: #{tpu_custom_call.1} parent=1 // pred_region
      %s55 = ssub.s32 1024, 1024
      %56 = vsyncadd [#allocation9], %s55
      %s57 = sshll.u32 [#allocation8], 4
      %s58 = int_to_ptr.vmem [resolvable:$true] %s57
      %63 = dma.hbm_to_vmem [thread:$0]  %s3, 1024, %s58, [#allocation9], 64, 64, 4
    $region17: #{tpu_custom_call.1} parent=1 // pred_fallthru
      _
    // Predicated region
    $region18: #{tpu_custom_call.1} parent=1 // pred_check
      _
    $region19: #{tpu_custom_call.1} parent=1 // pred_check_branch
      %65 = sbr.rel (0) target = $region21
    $region20: #{tpu_custom_call.1} parent=1 // pred_region
      %s67 = ssub.s32 1024, 1024
      %68 = vsyncadd [#allocation9], %s67
      %s69 = sshll.u32 [#allocation10], 4
      %s70 = int_to_ptr.vmem [resolvable:$true] %s69
      %75 = dma.hbm_to_vmem [thread:$0]  %s4, 1024, %s70, [#allocation9], 64, 64, 4
    $region21: #{tpu_custom_call.1} parent=1 // pred_fallthru
      _
    // Predicated region
    $region22: #{tpu_custom_call.1} parent=1 // pred_check
      _
    $region23: #{tpu_custom_call.1} parent=1 // pred_check_branch
      %77 = sbr.rel (0) target = $region25
    $region24: #{tpu_custom_call.1} parent=1 // pred_region
      _
    $region25: #{tpu_custom_call.1} parent=1 // pred_fallthru
      _
    // Predicated region
    $region26: #{tpu_custom_call.1} parent=1 // pred_check
      _
    $region27: #{tpu_custom_call.1} parent=1 // pred_check_branch
      %79 = sbr.rel (0) target = $region29
    $region28: #{tpu_custom_call.1} parent=1 // pred_region
      _
    $region29: #{tpu_custom_call.1} parent=1 // pred_fallthru
      _
    // Predicated region
    $region30: #{tpu_custom_call.1} parent=1 // pred_check
      _
    $region31: #{tpu_custom_call.1} parent=1 // pred_check_branch
      %81 = sbr.rel (0) target = $region33
    $region32: #{tpu_custom_call.1} parent=1 // pred_region
      %82 = dma.done [#allocation3], 256
    $region33: #{tpu_custom_call.1} parent=1 // pred_fallthru
      _
    // Predicated region
    $region34: #{tpu_custom_call.1} parent=1 // pred_check
      _
    $region35: #{tpu_custom_call.1} parent=1 // pred_check_branch
      %84 = sbr.rel (0) target = $region37
    $region36: #{tpu_custom_call.1} parent=1 // pred_region
      %85 = dma.done [#allocation6], 1024
    $region37: #{tpu_custom_call.1} parent=1 // pred_fallthru
      _
    // Predicated region
    $region38: #{tpu_custom_call.1} parent=1 // pred_check
      _
    $region39: #{tpu_custom_call.1} parent=1 // pred_check_branch
      %87 = sbr.rel (0) target = $region41
    $region40: #{tpu_custom_call.1} parent=1 // pred_region
      %88 = dma.done [#allocation6], 1024
    $region41: #{tpu_custom_call.1} parent=1 // pred_fallthru
      _
    // Predicated region
    $region42: #{tpu_custom_call.1} parent=1 // pred_check
      _
    $region43: #{tpu_custom_call.1} parent=1 // pred_check_branch
      %90 = sbr.rel (0) target = $region45
    $region44: #{tpu_custom_call.1} parent=1 // pred_region
      %91 = dma.done [#allocation9], 1024
    $region45: #{tpu_custom_call.1} parent=1 // pred_fallthru
      _
    // Predicated region
    $region46: #{tpu_custom_call.1} parent=1 // pred_check
      _
    $region47: #{tpu_custom_call.1} parent=1 // pred_check_branch
      %93 = sbr.rel (0) target = $region49
    $region48: #{tpu_custom_call.1} parent=1 // pred_region
      %94 = dma.done [#allocation9], 1024
    $region49: #{tpu_custom_call.1} parent=1 // pred_fallthru
      _
    %v96 = vld [vmem:[#allocation2] sm:$0xff]
    %v97 = vld [vmem:[#allocation2 + $0x8] sm:$0xff]
    %v98 = vld [vmem:[%s5] sm:$0xff]
    %v99 = vmul.f32 %v96, %v96
    %v100 = vmul.f32 %v97, %v97
    %v101 = vpack.c.bf16 %v100, %v99
    %v102 = vld [vmem:[#allocation5] sm:$0xf]
    %v103 = vld [vmem:[#allocation5 + $0x4] sm:$0xf]
    %v104 = vld [vmem:[#allocation5 + $0x8] sm:$0xf]
    %v105 = vld [vmem:[#allocation5 + $0xc] sm:$0xf]
    %v106 = vld [vmem:[#allocation5 + $0x10] sm:$0xf]
    %v107 = vld [vmem:[#allocation5 + $0x14] sm:$0xf]
    %v108 = vld [vmem:[#allocation5 + $0x18] sm:$0xf]
    %v109 = vld [vmem:[#allocation5 + $0x1c] sm:$0xf]
    %v110 = vld [vmem:[#allocation5 + $0x20] sm:$0xf]
    %v111 = vld [vmem:[#allocation5 + $0x24] sm:$0xf]
    %v112 = vld [vmem:[#allocation5 + $0x28] sm:$0xf]
    %v113 = vld [vmem:[#allocation5 + $0x2c] sm:$0xf]
    %v114 = vld [vmem:[#allocation5 + $0x30] sm:$0xf]
    %v115 = vld [vmem:[#allocation5 + $0x34] sm:$0xf]
    %v116 = vld [vmem:[#allocation5 + $0x38] sm:$0xf]
    %v117 = vld [vmem:[#allocation5 + $0x3c] sm:$0xf]
    %v118 = vlaneseq
    %v119 = vshrl.u32 %v118, 7
    %v120 = vsub.s32 0, %v119
    %v121 = vrot.slane %v98, %v120
    %v138 = vunpack.c.l.b16 %v102
    %v139 = vunpack.c.l.b16 %v103
    %v140 = vunpack.c.l.b16 %v104
    %v141 = vunpack.c.l.b16 %v105
    %v142 = vunpack.c.l.b16 %v106
    %v143 = vunpack.c.l.b16 %v107
    %v144 = vunpack.c.l.b16 %v108
    %v145 = vunpack.c.l.b16 %v109
    %v146 = vunpack.c.l.b16 %v110
    %v147 = vunpack.c.l.b16 %v111
    %v148 = vunpack.c.l.b16 %v112
    %v149 = vunpack.c.l.b16 %v113
    %v150 = vunpack.c.l.b16 %v114
    %v151 = vunpack.c.l.b16 %v115
    %v152 = vunpack.c.l.b16 %v116
    %v153 = vunpack.c.l.b16 %v117
    %v154 = vpack.c.b16 %v139, %v138
    %v155 = vpack.c.b16 %v141, %v140
    %v156 = vpack.c.b16 %v143, %v142
    %v157 = vpack.c.b16 %v145, %v144
    %v158 = vpack.c.b16 %v147, %v146
    %v159 = vpack.c.b16 %v149, %v148
    %v160 = vpack.c.b16 %v151, %v150
    %v161 = vpack.c.b16 %v153, %v152
    %170 = vmatprep.subr.bf16.mxu0 0
    %171 = vmatpush1.bf16.msra.mxu0 %v154
    %172 = vmatprep.subr.bf16.mxu0 0
    %173 = vmatpush1.bf16.msra.mxu0 %v155
    %174 = vmatprep.subr.bf16.mxu0 0
    %175 = vmatpush1.bf16.msra.mxu0 %v156
    %176 = vmatprep.subr.bf16.mxu0 0
    %177 = vmatpush1.bf16.msra.mxu0 %v157
    %178 = vmatprep.subr.bf16.mxu0 0
    %179 = vmatpush1.bf16.msra.mxu0 %v158
    %180 = vmatprep.subr.bf16.mxu0 0
    %181 = vmatpush1.bf16.msra.mxu0 %v159
    %182 = vmatprep.subr.bf16.mxu0 0
    %183 = vmatpush1.bf16.msra.mxu0 %v160
    %184 = vmatprep.subr.bf16.mxu0 0
    %185 = vmatpush1.bf16.msra.mxu0 %v161
    %186 = vmatprep.subr.bf16.mxu0 0
    %187 = vmatpush1.bf16.msra.mxu0 0
    %188 = vmatprep.subr.bf16.mxu0 0
    %189 = vmatpush1.bf16.msra.mxu0 0
    %190 = vmatprep.subr.bf16.mxu0 0
    %191 = vmatpush1.bf16.msra.mxu0 0
    %192 = vmatprep.subr.bf16.mxu0 0
    %193 = vmatpush1.bf16.msra.mxu0 0
    %194 = vmatprep.subr.bf16.mxu0 0
    %195 = vmatpush1.bf16.msra.mxu0 0
    %196 = vmatprep.subr.bf16.mxu0 0
    %197 = vmatpush1.bf16.msra.mxu0 0
    %198 = vmatprep.subr.bf16.mxu0 0
    %199 = vmatpush1.bf16.msra.mxu0 0
    %200 = vmatprep.subr.bf16.mxu0 0
    %201 = vmatpush1.bf16.msra.mxu0 0
    %202 = vmatprep.mubr.bf16.mxu0 0
    %203 = vmatmul.mubr.bf16.gmra.mrb[0].mxu0 %v101
    %v204 = vpop.f32.mrb[0].mxu0
    %v205 = vadd.f32 %v121, %v204
    %v206 = vpop.f32.mrb[0].mxu0
    %v207 = vpop.f32.mrb[0].mxu0
    %v208 = vadd.f32 %v121, %v207
    %v209 = vpop.f32.mrb[0].mxu0
    %210 = vdwg.mxu0
    %211 = vmax.xlane.f32.xlu0 %v205
    %v212 = vpop.xlane.xlu0 %211
    %213 = vmax.xlane.f32.xlu0 %v208
    %v214 = vpop.xlane.xlu0 %213
    %v215 = vsub.f32 %v205, %v212
    %v216 = vsub.f32 %v208, %v214
    %v217 = vmul.f32 %v215, 1.442695
    %v218 = vpow.pop %v217
    %v219 = vmul.f32 %v216, 1.442695
    %v220 = vpow.pop %v219
    %221 = vadd.xlane.f32.xlu0 %v218
    %v222 = vpop.xlane.xlu0 %221
    %223 = vadd.xlane.f32.xlu0 %v220
    %v224 = vpop.xlane.xlu0 %223
    %v225 = vrcp.pop %v222
    %v226 = vrcp.pop %v224
    %v227 = vmul.f32 %v218, %v225
    %v228 = vmul.f32 %v220, %v226
    %v229 = vmul.f32 %v227, %v96
    %v230 = vmul.f32 %v228, %v97
    %v231 = vadd.f32 %v96, %v229
    %v232 = vadd.f32 %v97, %v230
    %v233 = vlaneseq
    %v234 = vshrl.u32 %v233, 7
    %v235 = vsub.s32 1, %v234
    %v236 = vrot.slane %v98, %v235
    %v237 = vmul.f32 %v231, %v236
    %v238 = vmul.f32 %v232, %v236
    %v239 = vlaneseq
    %v240 = vshrl.u32 %v239, 7
    %v241 = vsub.s32 2, %v240
    %v242 = vrot.slane %v98, %v241
    %v243 = vadd.f32 %v237, %v242
    %v244 = vadd.f32 %v238, %v242
    %v245 = vpack.c.bf16 %v244, %v243
    %v246 = vld [vmem:[#allocation7] sm:$0xf]
    %v247 = vld [vmem:[#allocation7 + $0x4] sm:$0xf]
    %v248 = vld [vmem:[#allocation7 + $0x8] sm:$0xf]
    %v249 = vld [vmem:[#allocation7 + $0xc] sm:$0xf]
    %v250 = vld [vmem:[#allocation7 + $0x10] sm:$0xf]
    %v251 = vld [vmem:[#allocation7 + $0x14] sm:$0xf]
    %v252 = vld [vmem:[#allocation7 + $0x18] sm:$0xf]
    %v253 = vld [vmem:[#allocation7 + $0x1c] sm:$0xf]
    %v254 = vld [vmem:[#allocation7 + $0x20] sm:$0xf]
    %v255 = vld [vmem:[#allocation7 + $0x24] sm:$0xf]
    %v256 = vld [vmem:[#allocation7 + $0x28] sm:$0xf]
    %v257 = vld [vmem:[#allocation7 + $0x2c] sm:$0xf]
    %v258 = vld [vmem:[#allocation7 + $0x30] sm:$0xf]
    %v259 = vld [vmem:[#allocation7 + $0x34] sm:$0xf]
    %v260 = vld [vmem:[#allocation7 + $0x38] sm:$0xf]
    %v261 = vld [vmem:[#allocation7 + $0x3c] sm:$0xf]
    %v262 = vlaneseq
    %v263 = vshrl.u32 %v262, 7
    %v264 = vsub.s32 3, %v263
    %v265 = vrot.slane %v98, %v264
    %v282 = vunpack.c.l.b16 %v246
    %v283 = vunpack.c.l.b16 %v247
    %v284 = vunpack.c.l.b16 %v248
    %v285 = vunpack.c.l.b16 %v249
    %v286 = vunpack.c.l.b16 %v250
    %v287 = vunpack.c.l.b16 %v251
    %v288 = vunpack.c.l.b16 %v252
    %v289 = vunpack.c.l.b16 %v253
    %v290 = vunpack.c.l.b16 %v254
    %v291 = vunpack.c.l.b16 %v255
    %v292 = vunpack.c.l.b16 %v256
    %v293 = vunpack.c.l.b16 %v257
    %v294 = vunpack.c.l.b16 %v258
    %v295 = vunpack.c.l.b16 %v259
    %v296 = vunpack.c.l.b16 %v260
    %v297 = vunpack.c.l.b16 %v261
    %v298 = vpack.c.b16 %v283, %v282
    %v299 = vpack.c.b16 %v285, %v284
    %v300 = vpack.c.b16 %v287, %v286
    %v301 = vpack.c.b16 %v289, %v288
    %v302 = vpack.c.b16 %v291, %v290
    %v303 = vpack.c.b16 %v293, %v292
    %v304 = vpack.c.b16 %v295, %v294
    %v305 = vpack.c.b16 %v297, %v296
    %314 = vmatprep.subr.bf16.mxu0 0
    %315 = vmatpush1.bf16.msra.mxu0 %v298
    %316 = vmatprep.subr.bf16.mxu0 0
    %317 = vmatpush1.bf16.msra.mxu0 %v299
    %318 = vmatprep.subr.bf16.mxu0 0
    %319 = vmatpush1.bf16.msra.mxu0 %v300
    %320 = vmatprep.subr.bf16.mxu0 0
    %321 = vmatpush1.bf16.msra.mxu0 %v301
    %322 = vmatprep.subr.bf16.mxu0 0
    %323 = vmatpush1.bf16.msra.mxu0 %v302
    %324 = vmatprep.subr.bf16.mxu0 0
    %325 = vmatpush1.bf16.msra.mxu0 %v303
    %326 = vmatprep.subr.bf16.mxu0 0
    %327 = vmatpush1.bf16.msra.mxu0 %v304
    %328 = vmatprep.subr.bf16.mxu0 0
    %329 = vmatpush1.bf16.msra.mxu0 %v305
    %330 = vmatprep.subr.bf16.mxu0 0
    %331 = vmatpush1.bf16.msra.mxu0 0
    %332 = vmatprep.subr.bf16.mxu0 0
    %333 = vmatpush1.bf16.msra.mxu0 0
    %334 = vmatprep.subr.bf16.mxu0 0
    %335 = vmatpush1.bf16.msra.mxu0 0
    %336 = vmatprep.subr.bf16.mxu0 0
    %337 = vmatpush1.bf16.msra.mxu0 0
    %338 = vmatprep.subr.bf16.mxu0 0
    %339 = vmatpush1.bf16.msra.mxu0 0
    %340 = vmatprep.subr.bf16.mxu0 0
    %341 = vmatpush1.bf16.msra.mxu0 0
    %342 = vmatprep.subr.bf16.mxu0 0
    %343 = vmatpush1.bf16.msra.mxu0 0
    %344 = vmatprep.subr.bf16.mxu0 0
    %345 = vmatpush1.bf16.msra.mxu0 0
    %346 = vmatprep.mubr.bf16.mxu0 0
    %347 = vmatmul.mubr.bf16.gmra.mrb[0].mxu0 %v245
    %v348 = vpop.f32.mrb[0].mxu0
    %v349 = vadd.f32 %v265, %v348
    %v350 = vpop.f32.mrb[0].mxu0
    %v351 = vpop.f32.mrb[0].mxu0
    %v352 = vadd.f32 %v265, %v351
    %v353 = vpop.f32.mrb[0].mxu0
    %354 = vdwg.mxu0
    %v355 = vmax.f32 %v349, 0.0
    %v356 = vmax.f32 %v352, 0.0
    %v357 = vpack.c.bf16 %v356, %v355
    %v358 = vld [vmem:[#allocation8] sm:$0xf]
    %v359 = vld [vmem:[#allocation8 + $0x4] sm:$0xf]
    %v360 = vld [vmem:[#allocation8 + $0x8] sm:$0xf]
    %v361 = vld [vmem:[#allocation8 + $0xc] sm:$0xf]
    %v362 = vld [vmem:[#allocation8 + $0x10] sm:$0xf]
    %v363 = vld [vmem:[#allocation8 + $0x14] sm:$0xf]
    %v364 = vld [vmem:[#allocation8 + $0x18] sm:$0xf]
    %v365 = vld [vmem:[#allocation8 + $0x1c] sm:$0xf]
    %v366 = vld [vmem:[#allocation8 + $0x20] sm:$0xf]
    %v367 = vld [vmem:[#allocation8 + $0x24] sm:$0xf]
    %v368 = vld [vmem:[#allocation8 + $0x28] sm:$0xf]
    %v369 = vld [vmem:[#allocation8 + $0x2c] sm:$0xf]
    %v370 = vld [vmem:[#allocation8 + $0x30] sm:$0xf]
    %v371 = vld [vmem:[#allocation8 + $0x34] sm:$0xf]
    %v372 = vld [vmem:[#allocation8 + $0x38] sm:$0xf]
    %v373 = vld [vmem:[#allocation8 + $0x3c] sm:$0xf]
    %v374 = vlaneseq
    %v375 = vshrl.u32 %v374, 7
    %v376 = vsub.s32 4, %v375
    %v377 = vrot.slane %v98, %v376
    %v394 = vunpack.c.l.b16 %v358
    %v395 = vunpack.c.l.b16 %v359
    %v396 = vunpack.c.l.b16 %v360
    %v397 = vunpack.c.l.b16 %v361
    %v398 = vunpack.c.l.b16 %v362
    %v399 = vunpack.c.l.b16 %v363
    %v400 = vunpack.c.l.b16 %v364
    %v401 = vunpack.c.l.b16 %v365
    %v402 = vunpack.c.l.b16 %v366
    %v403 = vunpack.c.l.b16 %v367
    %v404 = vunpack.c.l.b16 %v368
    %v405 = vunpack.c.l.b16 %v369
    %v406 = vunpack.c.l.b16 %v370
    %v407 = vunpack.c.l.b16 %v371
    %v408 = vunpack.c.l.b16 %v372
    %v409 = vunpack.c.l.b16 %v373
    %v410 = vpack.c.b16 %v395, %v394
    %v411 = vpack.c.b16 %v397, %v396
    %v412 = vpack.c.b16 %v399, %v398
    %v413 = vpack.c.b16 %v401, %v400
    %v414 = vpack.c.b16 %v403, %v402
    %v415 = vpack.c.b16 %v405, %v404
    %v416 = vpack.c.b16 %v407, %v406
    %v417 = vpack.c.b16 %v409, %v408
    %426 = vmatprep.subr.bf16.mxu0 0
    %427 = vmatpush1.bf16.msra.mxu0 %v410
    %428 = vmatprep.subr.bf16.mxu0 0
    %429 = vmatpush1.bf16.msra.mxu0 %v411
    %430 = vmatprep.subr.bf16.mxu0 0
    %431 = vmatpush1.bf16.msra.mxu0 %v412
    %432 = vmatprep.subr.bf16.mxu0 0
    %433 = vmatpush1.bf16.msra.mxu0 %v413
    %434 = vmatprep.subr.bf16.mxu0 0
    %435 = vmatpush1.bf16.msra.mxu0 %v414
    %436 = vmatprep.subr.bf16.mxu0 0
    %437 = vmatpush1.bf16.msra.mxu0 %v415
    %438 = vmatprep.subr.bf16.mxu0 0
    %439 = vmatpush1.bf16.msra.mxu0 %v416
    %440 = vmatprep.subr.bf16.mxu0 0
    %441 = vmatpush1.bf16.msra.mxu0 %v417
    %442 = vmatprep.subr.bf16.mxu0 0
    %443 = vmatpush1.bf16.msra.mxu0 0
    %444 = vmatprep.subr.bf16.mxu0 0
    %445 = vmatpush1.bf16.msra.mxu0 0
    %446 = vmatprep.subr.bf16.mxu0 0
    %447 = vmatpush1.bf16.msra.mxu0 0
    %448 = vmatprep.subr.bf16.mxu0 0
    %449 = vmatpush1.bf16.msra.mxu0 0
    %450 = vmatprep.subr.bf16.mxu0 0
    %451 = vmatpush1.bf16.msra.mxu0 0
    %452 = vmatprep.subr.bf16.mxu0 0
    %453 = vmatpush1.bf16.msra.mxu0 0
    %454 = vmatprep.subr.bf16.mxu0 0
    %455 = vmatpush1.bf16.msra.mxu0 0
    %456 = vmatprep.subr.bf16.mxu0 0
    %457 = vmatpush1.bf16.msra.mxu0 0
    %458 = vmatprep.mubr.bf16.mxu0 0
    %459 = vmatmul.mubr.bf16.gmra.mrb[0].mxu0 %v357
    %v460 = vpop.f32.mrb[0].mxu0
    %v461 = vadd.f32 %v377, %v460
    %v462 = vpop.f32.mrb[0].mxu0
    %v463 = vpop.f32.mrb[0].mxu0
    %v464 = vadd.f32 %v377, %v463
    %v465 = vpop.f32.mrb[0].mxu0
    %466 = vdwg.mxu0
    %v467 = vmax.f32 %v461, 0.0
    %v468 = vmax.f32 %v464, 0.0
    %v469 = vadd.f32 %v243, %v467
    %v470 = vadd.f32 %v244, %v468
    %v471 = vlaneseq
    %v472 = vshrl.u32 %v471, 7
    %v473 = vsub.s32 5, %v472
    %v474 = vrot.slane %v98, %v473
    %v475 = vmul.f32 %v469, %v474
    %v476 = vmul.f32 %v470, %v474
    %v477 = vlaneseq
    %v478 = vshrl.u32 %v477, 7
    %v479 = vsub.s32 6, %v478
    %v480 = vrot.slane %v98, %v479
    %v481 = vadd.f32 %v475, %v480
    %v482 = vadd.f32 %v476, %v480
    %v483 = vpack.c.bf16 %v482, %v481
    %v484 = vld [vmem:[#allocation10] sm:$0xf]
    %v485 = vld [vmem:[#allocation10 + $0x4] sm:$0xf]
    %v486 = vld [vmem:[#allocation10 + $0x8] sm:$0xf]
    %v487 = vld [vmem:[#allocation10 + $0xc] sm:$0xf]
    %v488 = vld [vmem:[#allocation10 + $0x10] sm:$0xf]
    %v489 = vld [vmem:[#allocation10 + $0x14] sm:$0xf]
    %v490 = vld [vmem:[#allocation10 + $0x18] sm:$0xf]
    %v491 = vld [vmem:[#allocation10 + $0x1c] sm:$0xf]
    %v492 = vld [vmem:[#allocation10 + $0x20] sm:$0xf]
    %v493 = vld [vmem:[#allocation10 + $0x24] sm:$0xf]
    %v494 = vld [vmem:[#allocation10 + $0x28] sm:$0xf]
    %v495 = vld [vmem:[#allocation10 + $0x2c] sm:$0xf]
    %v496 = vld [vmem:[#allocation10 + $0x30] sm:$0xf]
    %v497 = vld [vmem:[#allocation10 + $0x34] sm:$0xf]
    %v498 = vld [vmem:[#allocation10 + $0x38] sm:$0xf]
    %v499 = vld [vmem:[#allocation10 + $0x3c] sm:$0xf]
    %v500 = vld [vmem:[%s6] sm:$0x1]
    %v502 = vlaneseq
    %v503 = vshrl.u32 %v502, 7
    %v504 = vsub.s32 0, %v503
    %v505 = vrot.slane %v500, %v504
    %v523 = vunpack.c.l.b16 %v484
    %v524 = vunpack.c.l.b16 %v485
    %v525 = vunpack.c.l.b16 %v486
    %v526 = vunpack.c.l.b16 %v487
    %v527 = vunpack.c.l.b16 %v488
    %v528 = vunpack.c.l.b16 %v489
    %v529 = vunpack.c.l.b16 %v490
    %v530 = vunpack.c.l.b16 %v491
    %v531 = vunpack.c.l.b16 %v492
    %v532 = vunpack.c.l.b16 %v493
    %v533 = vunpack.c.l.b16 %v494
    %v534 = vunpack.c.l.b16 %v495
    %v535 = vunpack.c.l.b16 %v496
    %v536 = vunpack.c.l.b16 %v497
    %v537 = vunpack.c.l.b16 %v498
    %v538 = vunpack.c.l.b16 %v499
    %v539 = vpack.c.b16 %v524, %v523
    %v540 = vpack.c.b16 %v526, %v525
    %v541 = vpack.c.b16 %v528, %v527
    %v542 = vpack.c.b16 %v530, %v529
    %v543 = vpack.c.b16 %v532, %v531
    %v544 = vpack.c.b16 %v534, %v533
    %v545 = vpack.c.b16 %v536, %v535
    %v546 = vpack.c.b16 %v538, %v537
    %555 = vmatprep.subr.bf16.mxu0 0
    %556 = vmatpush1.bf16.msra.mxu0 %v539
    %557 = vmatprep.subr.bf16.mxu0 0
    %558 = vmatpush1.bf16.msra.mxu0 %v540
    %559 = vmatprep.subr.bf16.mxu0 0
    %560 = vmatpush1.bf16.msra.mxu0 %v541
    %561 = vmatprep.subr.bf16.mxu0 0
    %562 = vmatpush1.bf16.msra.mxu0 %v542
    %563 = vmatprep.subr.bf16.mxu0 0
    %564 = vmatpush1.bf16.msra.mxu0 %v543
    %565 = vmatprep.subr.bf16.mxu0 0
    %566 = vmatpush1.bf16.msra.mxu0 %v544
    %567 = vmatprep.subr.bf16.mxu0 0
    %568 = vmatpush1.bf16.msra.mxu0 %v545
    %569 = vmatprep.subr.bf16.mxu0 0
    %570 = vmatpush1.bf16.msra.mxu0 %v546
    %571 = vmatprep.subr.bf16.mxu0 0
    %572 = vmatpush1.bf16.msra.mxu0 0
    %573 = vmatprep.subr.bf16.mxu0 0
    %574 = vmatpush1.bf16.msra.mxu0 0
    %575 = vmatprep.subr.bf16.mxu0 0
    %576 = vmatpush1.bf16.msra.mxu0 0
    %577 = vmatprep.subr.bf16.mxu0 0
    %578 = vmatpush1.bf16.msra.mxu0 0
    %579 = vmatprep.subr.bf16.mxu0 0
    %580 = vmatpush1.bf16.msra.mxu0 0
    %581 = vmatprep.subr.bf16.mxu0 0
    %582 = vmatpush1.bf16.msra.mxu0 0
    %583 = vmatprep.subr.bf16.mxu0 0
    %584 = vmatpush1.bf16.msra.mxu0 0
    %585 = vmatprep.subr.bf16.mxu0 0
    %586 = vmatpush1.bf16.msra.mxu0 0
    %587 = vmatprep.mubr.bf16.mxu0 0
    %588 = vmatmul.mubr.bf16.gmra.mrb[0].mxu0 %v483
    %v589 = vpop.f32.mrb[0].mxu0
    %v590 = vadd.f32 %v505, %v589
    %v591 = vpop.f32.mrb[0].mxu0
    %v592 = vpop.f32.mrb[0].mxu0
    %v593 = vadd.f32 %v505, %v592
    %v594 = vpop.f32.mrb[0].mxu0
    %595 = vdwg.mxu0
    %596 = vst [vmem:[#allocation11] sm:$0xff] %v590
    %597 = vst [vmem:[#allocation11 + $0x8] sm:$0xff] %v593
    // Predicated region
    $region50: #{tpu_custom_call.1} parent=1 // pred_check
      _
    $region51: #{tpu_custom_call.1} parent=1 // pred_check_branch
      %599 = sbr.rel (0) target = $region53
    $region52: #{tpu_custom_call.1} parent=1 // pred_region
      %s601 = ssub.s32 256, 256
      %602 = vsyncadd [#allocation4], %s601
      %s603 = sshll.u32 [#allocation11], 4
      %s604 = int_to_ptr.vmem [resolvable:$true] %s603
      %609 = dma.vmem_to_hbm [thread:$0]  %s604, 256, %s7, [#allocation4], 128, 128, 8
    $region53: #{tpu_custom_call.1} parent=1 // pred_fallthru
      _
    // Predicated region
    $region54: #{tpu_custom_call.1} parent=1 // pred_check
      _
    $region55: #{tpu_custom_call.1} parent=1 // pred_check_branch
      %611 = sbr.rel (0) target = $region57
    $region56: #{tpu_custom_call.1} parent=1 // pred_region
      %612 = dma.done [#allocation4], 256
    $region57: #{tpu_custom_call.1} parent=1 // pred_fallthru
      _
    %613 = vsyncpa [#allocation3], 1
    %614 = vsyncpa [#allocation6], 1
    %615 = vsyncpa [#allocation9], 1
    %616 = vsyncpa [#allocation4], 1

</llo_original>
